<compile_context>
chip_gen: v5e
topology: v5e:2x2
jax: 0.10.0
libtpu: 0.0.40
codegen_flags: <defaults>
</compile_context>

<pallas_src>
import functools
import math

import jax
import jax.numpy as jnp
from jax.experimental import pallas as pl
from jax.experimental.pallas import tpu as pltpu


def _round_up(x: int, m: int) -> int:
    return ((x + m - 1) // m) * m


def _pick_tiles(n: int, e: int) -> tuple[int, int]:
    """Node / edge tile sizes.

    tn: as large as reasonable, but split into >=2 tiles when n allows so the
        'parallel' node axis keeps both TensorCores busy on v7x.
    te: large edge tiles (amortize ~600-cycle per-grid-step overhead); capped
        at 2048 which keeps the (tn, te) one-hot + double-buffered streams at
        a few MiB — far under every generation's scoped VMEM default.
    """
    if n >= 1024:
        tn = 512
    elif n >= 16:
        tn = _round_up(-(-n // 2), 8)        # ceil(n/2), sublane aligned -> 2 tiles
    else:
        tn = _round_up(max(n, 1), 8)
    te = 2048 if e >= 2048 else _round_up(max(e, 1), 128)
    return tn, te


# ----------------------------------------------------------------------------
# Pallas kernel: one full InnerGNN block
#   agg = scatter_sum(msg, dst)     (on-the-fly one-hot @ msg on the MXU,
#                                    restricted to this node-tile's edge range)
#   h   = relu(agg @ W1 + b1)       (bf16 x bf16, f32 accum)
#   y   = h @ W2 + b2
#   y   = LayerNorm(y)              (stats over the TRUE feature lanes)
#   y   = y * gamma/sqrt(N) + beta/sqrt(N)   (SqrtGraphNorm folded in)
#   y   = relu(y)                   (has_last_act)
#   out = y + node_feats            (residual; dropout = identity at eval)
# ----------------------------------------------------------------------------
def _inner_gnn_kernel(sblk_ref, nblk_ref, dst_ref, msg_ref, x_ref,
                      w1_ref, b1_ref, w2_ref, b2_ref, g_ref, bta_ref,
                      out_ref, acc_ref, *, d_true: int, has_last_act: bool):
    i = pl.program_id(0)
    k = pl.program_id(1)
    tn = out_ref.shape[0]
    te = msg_ref.shape[0]
    dp = out_ref.shape[1]

    @pl.when(k == 0)
    def _():
        acc_ref[...] = jnp.zeros_like(acc_ref)

    # Only the first nblk[i] k-steps carry this tile's edges; later steps clamp
    # to the same edge block (no re-fetch) and are skipped here.
    @pl.when(k < nblk_ref[i])
    def _():
        # One-hot adjacency tile (tn, te) built on the fly.  The grid offset is
        # applied to the small (1, te) dst row, not the (tn, te) iota.
        row_ids = jax.lax.broadcasted_iota(jnp.int32, (tn, te), 0)
        dst_local = dst_ref[...] - i * tn                 # sentinel/foreign dst never match
        adj = (row_ids == dst_local).astype(jnp.bfloat16)
        acc_ref[...] += jnp.dot(adj, msg_ref[...],
                                preferred_element_type=jnp.float32)

    @pl.when(k == pl.num_programs(1) - 1)
    def _():
        agg = acc_ref[...].astype(jnp.bfloat16)           # (tn, d_true)
        h = jnp.dot(agg, w1_ref[...],
                    preferred_element_type=jnp.float32) + b1_ref[...]
        h = jnp.maximum(h, 0.0).astype(jnp.bfloat16)
        y = jnp.dot(h, w2_ref[...],
                    preferred_element_type=jnp.float32) + b2_ref[...]

        # LayerNorm over the TRUE feature lanes (padded lanes masked out).
        lane = jax.lax.broadcasted_iota(jnp.int32, (1, dp), 1)
        lane_mask = (lane < d_true).astype(jnp.float32)
        inv_d = 1.0 / float(d_true)
        y = y * lane_mask
        mu = jnp.sum(y, axis=-1, keepdims=True) * inv_d
        diff = (y - mu) * lane_mask
        var = jnp.sum(diff * diff, axis=-1, keepdims=True) * inv_d
        y = diff * jax.lax.rsqrt(var + 1e-5)

        # gamma/beta already scaled by 1/sqrt(num_nodes) (SqrtGraphNorm) and
        # zero on padded lanes, so padded output lanes stay exactly zero.
        y = y * g_ref[...] + bta_ref[...]
        if has_last_act:
            y = jnp.maximum(y, 0.0)
        # dropout: identity at inference (nn.Dropout in eval mode)
        out_ref[...] = y + x_ref[...]


def inner_gnn_forward(params, src, dst, num_nodes, node_feats, edge_feats,
                      has_last_act=True):
    """InnerGNN.forward. Pallas does aggregation + MLP + norms + residual."""
    n, d = node_feats.shape
    e = edge_feats.shape[0]
    dp = _round_up(d, 128)                        # lane-dense node-feature dim
    hp = _round_up(2 * d, 128)                    # lane-dense hidden dim
    tn, te = _pick_tiles(n, e)
    n_pad = _round_up(n, tn)
    e_pad = _round_up(e, te)
    nt = n_pad // tn
    ke = e_pad // te
    # TODO(synk): ke is the static worst case (full edge stream); for very
    # large graphs a host-computed static per-tile block bound would also cut
    # the (cheap, compute/DMA-free) skipped grid steps.

    # --- parameters: bf16 matmul weights, f32 biases / LN affine ---
    w1 = jnp.pad(params["w1"].astype(jnp.bfloat16), ((0, 0), (0, hp - 2 * d)))
    b1 = jnp.pad(params["b1"], ((0, 0), (0, hp - 2 * d)))
    w2 = jnp.pad(params["w2"].astype(jnp.bfloat16), ((0, hp - 2 * d), (0, dp - d)))
    b2 = jnp.pad(params["b2"], ((0, 0), (0, dp - d)))
    inv_sqrt_n = 1.0 / math.sqrt(num_nodes)       # SqrtGraphNorm folded into LN affine
    gamma = jnp.pad(params["ln_gamma"] * inv_sqrt_n, ((0, 0), (0, dp - d)))
    beta = jnp.pad(params["ln_beta"] * inv_sqrt_n, ((0, 0), (0, dp - d)))

    # --- graph prep: sort edges by dst, narrow bf16 messages, edge ranges ---
    src = src.astype(jnp.int32)
    dst = dst.astype(jnp.int32)
    order = jnp.argsort(dst)
    src_s = src[order]
    dst_s = dst[order]
    msg = (node_feats[src_s] + edge_feats[order]).astype(jnp.bfloat16)  # (e, d)
    msg = jnp.pad(msg, ((0, e_pad - e), (0, 0)))                        # true-width stream
    dst_s = jnp.pad(dst_s, (0, e_pad - e), constant_values=n_pad)       # sentinel never matches
    dst2d = dst_s.reshape(1, e_pad)
    x_pad = jnp.pad(node_feats, ((0, n_pad - n), (0, dp - d)))

    # Per-node-tile edge-block range (scalar prefetch -> SMEM).
    tile_lo = jnp.arange(nt, dtype=jnp.int32) * tn
    lo = jnp.searchsorted(dst_s, tile_lo).astype(jnp.int32)
    hi = jnp.searchsorted(dst_s, tile_lo + tn).astype(jnp.int32)
    sblk = jnp.minimum(lo // te, ke - 1).astype(jnp.int32)
    nblk = jnp.where(hi > lo, (hi - 1) // te - lo // te + 1, 0).astype(jnp.int32)

    def edge_block(i, k, sblk_ref, nblk_ref):
        # clamp redundant k-steps to the tile's last valid block (no re-fetch)
        last = jnp.maximum(nblk_ref[i], 1) - 1
        return sblk_ref[i] + jnp.minimum(k, last)

    kernel = functools.partial(_inner_gnn_kernel, d_true=d,
                               has_last_act=has_last_act)
    res = lambda i, k, s, c: (0, 0)               # weights stay VMEM resident
    out = pl.pallas_call(
        kernel,
        out_shape=jax.ShapeDtypeStruct((n_pad, dp), jnp.float32),
        grid_spec=pltpu.PrefetchScalarGridSpec(
            num_scalar_prefetch=2,
            grid=(nt, ke),
            in_specs=[
                pl.BlockSpec((1, te),
                             lambda i, k, s, c: (0, edge_block(i, k, s, c))),   # dst ids
                pl.BlockSpec((te, d),
                             lambda i, k, s, c: (edge_block(i, k, s, c), 0)),   # messages
                pl.BlockSpec((tn, dp), lambda i, k, s, c: (i, 0)),              # residual in
                pl.BlockSpec((d, hp), res),                                     # W1 (bf16)
                pl.BlockSpec((1, hp), res),                                     # b1
                pl.BlockSpec((hp, dp), res),                                    # W2 (bf16)
                pl.BlockSpec((1, dp), res),                                     # b2
                pl.BlockSpec((1, dp), res),                                     # gamma/sqrt(N)
                pl.BlockSpec((1, dp), res),                                     # beta /sqrt(N)
            ],
            out_specs=pl.BlockSpec((tn, dp), lambda i, k, s, c: (i, 0)),
            scratch_shapes=[pltpu.VMEM((tn, d), jnp.float32)],                  # narrow acc
        ),
        compiler_params=pltpu.CompilerParams(
            dimension_semantics=("parallel", "arbitrary")),
    )(sblk, nblk, dst2d, msg, x_pad, w1, b1, w2, b2, gamma, beta)
    return out[:n, :d]


# ----------------------------------------------------------------------------
# Feature embedding / RBF glue (small, plain JAX, fused under the outer jit)
# ----------------------------------------------------------------------------
def features_embedding(tables, int_feats):
    out = 0.0
    for name, table in tables.items():
        out = out + table[int_feats[name]]
    return out


def features_rbf(rbf_params, float_feats):
    out = 0.0
    for name, p in rbf_params.items():
        x = float_feats[name]                                   # (E,)
        rbf = jnp.exp(-p["gamma"] * (x[:, None] - p["centers"][None, :]) ** 2)
        out = out + rbf @ p["w"] + p["b"]
    return out


# ----------------------------------------------------------------------------
# GeoGNNLayer.forward (single jit: both InnerGNN blocks + all glue)
# ----------------------------------------------------------------------------
@functools.partial(jax.jit, static_argnums=(5, 6))
def geognn_layer_forward(params, ab_graph, ba_graph, node_feats, edge_feats,
                         n_atoms, n_bonds):
    # 1) atom-bond GNN block -> node representation
    node_out = inner_gnn_forward(params["atom_bond_gnn"], ab_graph["src"],
                                 ab_graph["dst"], n_atoms,
                                 node_feats, edge_feats, has_last_act=True)
    # 2) fresh bond embeddings from raw bond features
    bond_embed = (features_embedding(params["bond_embedding"], ab_graph["edata_int"])
                  + features_rbf(params["bond_rbf"], ab_graph["edata_float"]))
    bond_embed = bond_embed[::2]                 # one row per undirected bond
    # 3) bond-angle RBF embeddings
    bond_angle_embed = features_rbf(params["bond_angle_rbf"], ba_graph["edata_float"])
    # 4) bond-angle GNN block -> edge representation
    edge_out = inner_gnn_forward(params["bond_angle_gnn"], ba_graph["src"],
                                 ba_graph["dst"], n_bonds,
                                 bond_embed, bond_angle_embed, has_last_act=True)
    edge_out = jnp.repeat(edge_out, 2, axis=0)   # repeat_interleave(2, dim=0)
    return node_out, edge_out


# ----------------------------------------------------------------------------
# Pure-JAX reference of InnerGNN (for correctness check)
# ----------------------------------------------------------------------------
def inner_gnn_ref(params, src, dst, num_nodes, node_feats, edge_feats,
                  has_last_act=True):
    msg = node_feats[src] + edge_feats
    agg = jax.ops.segment_sum(msg, dst, num_nodes)
    h = jax.nn.relu(agg @ params["w1"] + params["b1"])
    y = h @ params["w2"] + params["b2"]
    mu = y.mean(-1, keepdims=True)
    var = ((y - mu) ** 2).mean(-1, keepdims=True)
    y = (y - mu) / jnp.sqrt(var + 1e-5) * params["ln_gamma"] + params["ln_beta"]
    y = y / jnp.sqrt(jnp.float32(num_nodes))
    if has_last_act:
        y = jax.nn.relu(y)
    return y + node_feats


# ----------------------------------------------------------------------------
# Deterministic parameter init
# ----------------------------------------------------------------------------
def init_linear(key, fan_in, fan_out):
    kw, kb = jax.random.split(key)
    w = 0.1 * jax.random.normal(kw, (fan_in, fan_out), jnp.float32)
    b = 0.01 * jax.random.normal(kb, (1, fan_out), jnp.float32)
    return w, b


def init_inner_gnn(key, embed_dim):
    k1, k2 = jax.random.split(key)
    w1, b1 = init_linear(k1, embed_dim, embed_dim * 2)
    w2, b2 = init_linear(k2, embed_dim * 2, embed_dim)
    return dict(w1=w1, b1=b1, w2=w2, b2=b2,
                ln_gamma=jnp.ones((1, embed_dim), jnp.float32),
                ln_beta=jnp.zeros((1, embed_dim), jnp.float32))


if __name__ == "__main__":
    embed_dim = 32
    n_atoms = 8
    n_bonds = 8
    n_ab_edges = 2 * n_bonds          # atom-bond graph: 2 directed edges / bond
    n_ba_edges = 12                   # bond-angle graph edges

    keys = jax.random.split(jax.random.PRNGKey(0), 16)
    params = {
        "atom_bond_gnn": init_inner_gnn(keys[0], embed_dim),
        "bond_angle_gnn": init_inner_gnn(keys[1], embed_dim),
        "bond_embedding": {   # LABEL_ENCODED_BOND_FEATURES (synthetic vocab sizes)
            "bond_dir":   0.1 * jax.random.normal(keys[2], (8, embed_dim), jnp.float32),
            "bond_type":  0.1 * jax.random.normal(keys[3], (8, embed_dim), jnp.float32),
            "is_in_ring": 0.1 * jax.random.normal(keys[4], (4, embed_dim), jnp.float32),
        },
        "bond_rbf": {         # FLOAT_BOND_FEATURES
            "bond_length": dict(
                centers=jnp.arange(0.0, 2.0, 0.1, dtype=jnp.float32),
                gamma=jnp.float32(10.0),
                w=0.1 * jax.random.normal(keys[5], (20, embed_dim), jnp.float32),
                b=jnp.zeros((embed_dim,), jnp.float32)),
        },
        "bond_angle_rbf": {   # FLOAT_BOND_ANGLE_FEATURES
            "bond_angle": dict(
                centers=jnp.arange(0.0, math.pi, 0.1, dtype=jnp.float32),
                gamma=jnp.float32(10.0),
                w=0.1 * jax.random.normal(keys[6], (32, embed_dim), jnp.float32),
                b=jnp.zeros((embed_dim,), jnp.float32)),
        },
    }

    # atom-bond graph: directed edge pairs (u->v, v->u) per bond
    bond_u = jax.random.randint(keys[7], (n_bonds,), 0, n_atoms)
    bond_v = jax.random.randint(keys[8], (n_bonds,), 0, n_atoms)
    ab_src = jnp.stack([bond_u, bond_v], axis=1).reshape(-1)
    ab_dst = jnp.stack([bond_v, bond_u], axis=1).reshape(-1)
    atom_bond_graph = dict(
        src=ab_src, dst=ab_dst,
        edata_int={
            "bond_dir":   jnp.repeat(jax.random.randint(keys[9],  (n_bonds,), 0, 8), 2),
            "bond_type":  jnp.repeat(jax.random.randint(keys[10], (n_bonds,), 0, 8), 2),
            "is_in_ring": jnp.repeat(jax.random.randint(keys[11], (n_bonds,), 0, 4), 2),
        },
        edata_float={
            "bond_length": jnp.repeat(
                jax.random.uniform(keys[12], (n_bonds,), minval=0.9, maxval=1.8), 2),
        })
    bond_angle_graph = dict(
        src=jax.random.randint(keys[13], (n_ba_edges,), 0, n_bonds),
        dst=jax.random.randint(keys[14], (n_ba_edges,), 0, n_bonds),
        edata_float={"bond_angle": jax.random.uniform(
            keys[15], (n_ba_edges,), minval=0.0, maxval=math.pi)})

    node_feats = jax.random.normal(jax.random.PRNGKey(1), (n_atoms, embed_dim), jnp.float32)
    edge_feats = jax.random.normal(jax.random.PRNGKey(2), (n_ab_edges, embed_dim), jnp.float32)

    node_out, edge_out = geognn_layer_forward(params, atom_bond_graph,
                                              bond_angle_graph, node_feats,
                                              edge_feats, n_atoms, n_bonds)
    jax.block_until_ready((node_out, edge_out))

    # ---- reference check (pure JAX) ----
    node_ref = inner_gnn_ref(params["atom_bond_gnn"], ab_src, ab_dst, n_atoms,
                             node_feats, edge_feats)
    bond_embed = (features_embedding(params["bond_embedding"], atom_bond_graph["edata_int"])
                  + features_rbf(params["bond_rbf"], atom_bond_graph["edata_float"]))[::2]
    angle_embed = features_rbf(params["bond_angle_rbf"], bond_angle_graph["edata_float"])
    edge_ref = jnp.repeat(
        inner_gnn_ref(params["bond_angle_gnn"], bond_angle_graph["src"],
                      bond_angle_graph["dst"], n_bonds, bond_embed, angle_embed),
        2, axis=0)

    assert node_out.shape == (n_atoms, embed_dim)
    assert edge_out.shape == (n_ab_edges, embed_dim)
    assert jnp.allclose(node_out, node_ref, atol=2e-2, rtol=2e-2)
    assert jnp.allclose(edge_out, edge_ref, atol=2e-2, rtol=2e-2)
    print("KERNEL_OK")
</pallas_src>

<mosaic_0001>
module attributes {stable_mosaic.version = 11 : i64} {
  func.func @_inner_gnn_kernel(%arg0: i32, %arg1: i32, %arg2: memref<1xi32, #tpu.memory_space<smem>>, %arg3: memref<1xi32, #tpu.memory_space<smem>>, %arg4: memref<1x128xi32, #tpu.memory_space<vmem>>, %arg5: memref<128x32xbf16, #tpu.memory_space<vmem>>, %arg6: memref<8x128xf32, #tpu.memory_space<vmem>>, %arg7: memref<32x128xbf16, #tpu.memory_space<vmem>>, %arg8: memref<1x128xf32, #tpu.memory_space<vmem>>, %arg9: memref<128x128xbf16, #tpu.memory_space<vmem>>, %arg10: memref<1x128xf32, #tpu.memory_space<vmem>>, %arg11: memref<1x128xf32, #tpu.memory_space<vmem>>, %arg12: memref<1x128xf32, #tpu.memory_space<vmem>>, %arg13: memref<8x128xf32, #tpu.memory_space<vmem>>, %arg14: memref<8x32xf32, #tpu.memory_space<vmem>>) attributes {dimension_semantics = [#tpu.dimension_semantics<parallel>, #tpu.dimension_semantics<arbitrary>], iteration_bounds = array<i64: 1, 1>, scalar_prefetch = 2 : i64, scratch_operands = 1 : i64, tpu.core_type = #tpu.core_type<tc>, window_params = [{transform_indices = @transform_0, window_bounds = array<i64: 1, 128>}, {transform_indices = @transform_1, window_bounds = array<i64: 128, 32>}, {transform_indices = @transform_2, window_bounds = array<i64: 8, 128>}, {pipeline_mode = #tpu.pipeline_mode<synchronous>, transform_indices = @transform_3, window_bounds = array<i64: 32, 128>}, {pipeline_mode = #tpu.pipeline_mode<synchronous>, transform_indices = @transform_4, window_bounds = array<i64: 1, 128>}, {pipeline_mode = #tpu.pipeline_mode<synchronous>, transform_indices = @transform_5, window_bounds = array<i64: 128, 128>}, {pipeline_mode = #tpu.pipeline_mode<synchronous>, transform_indices = @transform_6, window_bounds = array<i64: 1, 128>}, {pipeline_mode = #tpu.pipeline_mode<synchronous>, transform_indices = @transform_7, window_bounds = array<i64: 1, 128>}, {pipeline_mode = #tpu.pipeline_mode<synchronous>, transform_indices = @transform_8, window_bounds = array<i64: 1, 128>}, {transform_indices = @transform_9, window_bounds = array<i64: 8, 128>}]} {
    %c0_i32 = arith.constant 0 : i32
    %0 = arith.cmpi eq, %arg1, %c0_i32 : i32
    %1 = arith.extui %0 : i1 to i32
    %c0_i32_0 = arith.constant 0 : i32
    %2 = arith.cmpi ne, %1, %c0_i32_0 : i32
    scf.if %2 {
      %cst = arith.constant 0.000000e+00 : f32
      %11 = vector.broadcast %cst : f32 to vector<8x32xf32>
      %c0 = arith.constant 0 : index
      %c0_4 = arith.constant 0 : index
      %12 = vector.load %arg14[%c0, %c0_4] : memref<8x32xf32, #tpu.memory_space<vmem>>, vector<8x32xf32>
      tpu.vector_store %arg14[%c0, %c0_4], %11 {strides = array<i32>} : memref<8x32xf32, #tpu.memory_space<vmem>>, vector<8x32xf32>,
    } else {
    }
    %3 = arith.index_cast %arg0 : i32 to index
    %4 = memref.load %arg3[%3] : memref<1xi32, #tpu.memory_space<smem>>
    %5 = arith.cmpi slt, %arg1, %4 : i32
    %6 = arith.extui %5 : i1 to i32
    %c0_i32_1 = arith.constant 0 : i32
    %7 = arith.cmpi ne, %6, %c0_i32_1 : i32
    scf.if %7 {
      %11 = tpu.iota {dimensions = array<i32: 0>} : vector<8x128xi32>
      %c0 = arith.constant 0 : index
      %c0_4 = arith.constant 0 : index
      %12 = vector.load %arg4[%c0, %c0_4] : memref<1x128xi32, #tpu.memory_space<vmem>>, vector<1x128xi32>
      %c8_i32 = arith.constant 8 : i32
      %13 = arith.muli %arg0, %c8_i32 : i32
      %14 = vector.broadcast %13 : i32 to vector<1x128xi32>
      %15 = arith.subi %12, %14 : vector<1x128xi32>
      %16 = vector.broadcast %15 : vector<1x128xi32> to vector<8x128xi32>
      %17 = arith.cmpi eq, %11, %16 : vector<8x128xi32>
      %18 = arith.extui %17 : vector<8x128xi1> to vector<8x128xi32>
      %19 = arith.sitofp %18 : vector<8x128xi32> to vector<8x128xf32>
      %20 = arith.truncf %19 : vector<8x128xf32> to vector<8x128xbf16>
      %c0_5 = arith.constant 0 : index
      %c0_6 = arith.constant 0 : index
      %21 = vector.load %arg14[%c0_5, %c0_6] : memref<8x32xf32, #tpu.memory_space<vmem>>, vector<8x32xf32>
      %c0_7 = arith.constant 0 : index
      %c0_8 = arith.constant 0 : index
      %22 = vector.load %arg5[%c0_7, %c0_8] : memref<128x32xbf16, #tpu.memory_space<vmem>>, vector<128x32xbf16>
      %cst = arith.constant dense<0.000000e+00> : vector<8x32xf32>
      %23 = tpu.matmul %20, %22, %cst {dimension_numbers = #tpu.dot_dimension_numbers<[1], [0], [0], [1], [0, 0, 1, 1], [], []>} : vector<8x128xbf16>, vector<128x32xbf16>, vector<8x32xf32> -> vector<8x32xf32>
      %24 = arith.addf %21, %23 : vector<8x32xf32>
      %c0_9 = arith.constant 0 : index
      %c0_10 = arith.constant 0 : index
      %25 = vector.load %arg14[%c0_9, %c0_10] : memref<8x32xf32, #tpu.memory_space<vmem>>, vector<8x32xf32>
      tpu.vector_store %arg14[%c0_9, %c0_10], %24 {strides = array<i32>} : memref<8x32xf32, #tpu.memory_space<vmem>>, vector<8x32xf32>,
    } else {
    }
    %c0_i32_2 = arith.constant 0 : i32
    %8 = arith.cmpi eq, %arg1, %c0_i32_2 : i32
    %9 = arith.extui %8 : i1 to i32
    %c0_i32_3 = arith.constant 0 : i32
    %10 = arith.cmpi ne, %9, %c0_i32_3 : i32
    scf.if %10 {
      %c0 = arith.constant 0 : index
      %c0_4 = arith.constant 0 : index
      %11 = vector.load %arg14[%c0, %c0_4] : memref<8x32xf32, #tpu.memory_space<vmem>>, vector<8x32xf32>
      %12 = arith.truncf %11 : vector<8x32xf32> to vector<8x32xbf16>
      %c0_5 = arith.constant 0 : index
      %c0_6 = arith.constant 0 : index
      %13 = vector.load %arg7[%c0_5, %c0_6] : memref<32x128xbf16, #tpu.memory_space<vmem>>, vector<32x128xbf16>
      %cst = arith.constant dense<0.000000e+00> : vector<8x128xf32>
      %14 = tpu.matmul %12, %13, %cst {dimension_numbers = #tpu.dot_dimension_numbers<[1], [0], [0], [1], [0, 0, 1, 1], [], []>} : vector<8x32xbf16>, vector<32x128xbf16>, vector<8x128xf32> -> vector<8x128xf32>
      %c0_7 = arith.constant 0 : index
      %c0_8 = arith.constant 0 : index
      %15 = vector.load %arg8[%c0_7, %c0_8] : memref<1x128xf32, #tpu.memory_space<vmem>>, vector<1x128xf32>
      %16 = vector.broadcast %15 : vector<1x128xf32> to vector<8x128xf32>
      %17 = arith.addf %14, %16 : vector<8x128xf32>
      %cst_9 = arith.constant 0.000000e+00 : f32
      %18 = vector.broadcast %cst_9 : f32 to vector<8x128xf32>
      %19 = arith.maximumf %17, %18 : vector<8x128xf32>
      %20 = arith.truncf %19 : vector<8x128xf32> to vector<8x128xbf16>
      %c0_10 = arith.constant 0 : index
      %c0_11 = arith.constant 0 : index
      %21 = vector.load %arg9[%c0_10, %c0_11] : memref<128x128xbf16, #tpu.memory_space<vmem>>, vector<128x128xbf16>
      %cst_12 = arith.constant dense<0.000000e+00> : vector<8x128xf32>
      %22 = tpu.matmul %20, %21, %cst_12 {dimension_numbers = #tpu.dot_dimension_numbers<[1], [0], [0], [1], [0, 0, 1, 1], [], []>} : vector<8x128xbf16>, vector<128x128xbf16>, vector<8x128xf32> -> vector<8x128xf32>
      %c0_13 = arith.constant 0 : index
      %c0_14 = arith.constant 0 : index
      %23 = vector.load %arg10[%c0_13, %c0_14] : memref<1x128xf32, #tpu.memory_space<vmem>>, vector<1x128xf32>
      %24 = vector.broadcast %23 : vector<1x128xf32> to vector<8x128xf32>
      %25 = arith.addf %22, %24 : vector<8x128xf32>
      %26 = tpu.iota {dimensions = array<i32: 1>} : vector<1x128xi32>
      %c32_i32 = arith.constant 32 : i32
      %27 = vector.broadcast %c32_i32 : i32 to vector<1x128xi32>
      %28 = arith.cmpi slt, %26, %27 : vector<1x128xi32>
      %29 = arith.extui %28 : vector<1x128xi1> to vector<1x128xi32>
      %30 = arith.sitofp %29 : vector<1x128xi32> to vector<1x128xf32>
      %31 = vector.broadcast %30 : vector<1x128xf32> to vector<8x128xf32>
      %32 = arith.mulf %25, %31 : vector<8x128xf32>
      %cst_15 = arith.constant dense<0.000000e+00> : vector<8xf32>
      %33 = vector.multi_reduction <add>, %32, %cst_15 [1] : vector<8x128xf32> to vector<8xf32>
      %34 = vector.shape_cast %33 : vector<8xf32> to vector<8x1xf32>
      %cst_16 = arith.constant 3.125000e-02 : f32
      %35 = vector.broadcast %cst_16 : f32 to vector<8x1xf32>
      %36 = arith.mulf %34, %35 : vector<8x1xf32>
      %37 = vector.broadcast %36 : vector<8x1xf32> to vector<8x128xf32>
      %38 = arith.subf %32, %37 : vector<8x128xf32>
      %39 = vector.broadcast %30 : vector<1x128xf32> to vector<8x128xf32>
      %40 = arith.mulf %38, %39 : vector<8x128xf32>
      %41 = arith.mulf %40, %40 : vector<8x128xf32>
      %cst_17 = arith.constant dense<0.000000e+00> : vector<8xf32>
      %42 = vector.multi_reduction <add>, %41, %cst_17 [1] : vector<8x128xf32> to vector<8xf32>
      %43 = vector.shape_cast %42 : vector<8xf32> to vector<8x1xf32>
      %cst_18 = arith.constant 3.125000e-02 : f32
      %44 = vector.broadcast %cst_18 : f32 to vector<8x1xf32>
      %45 = arith.mulf %43, %44 : vector<8x1xf32>
      %cst_19 = arith.constant 9.99999974E-6 : f32
      %46 = vector.broadcast %cst_19 : f32 to vector<8x1xf32>
      %47 = arith.addf %45, %46 : vector<8x1xf32>
      %48 = math.rsqrt %47 : vector<8x1xf32>
      %49 = vector.broadcast %48 : vector<8x1xf32> to vector<8x128xf32>
      %50 = arith.mulf %40, %49 : vector<8x128xf32>
      %c0_20 = arith.constant 0 : index
      %c0_21 = arith.constant 0 : index
      %51 = vector.load %arg11[%c0_20, %c0_21] : memref<1x128xf32, #tpu.memory_space<vmem>>, vector<1x128xf32>
      %52 = vector.broadcast %51 : vector<1x128xf32> to vector<8x128xf32>
      %53 = arith.mulf %50, %52 : vector<8x128xf32>
      %c0_22 = arith.constant 0 : index
      %c0_23 = arith.constant 0 : index
      %54 = vector.load %arg12[%c0_22, %c0_23] : memref<1x128xf32, #tpu.memory_space<vmem>>, vector<1x128xf32>
      %55 = vector.broadcast %54 : vector<1x128xf32> to vector<8x128xf32>
      %56 = arith.addf %53, %55 : vector<8x128xf32>
      %cst_24 = arith.constant 0.000000e+00 : f32
      %57 = vector.broadcast %cst_24 : f32 to vector<8x128xf32>
      %58 = arith.maximumf %56, %57 : vector<8x128xf32>
      %c0_25 = arith.constant 0 : index
      %c0_26 = arith.constant 0 : index
      %59 = vector.load %arg6[%c0_25, %c0_26] : memref<8x128xf32, #tpu.memory_space<vmem>>, vector<8x128xf32>
      %60 = arith.addf %58, %59 : vector<8x128xf32>
      %c0_27 = arith.constant 0 : index
      %c0_28 = arith.constant 0 : index
      %61 = vector.load %arg13[%c0_27, %c0_28] : memref<8x128xf32, #tpu.memory_space<vmem>>, vector<8x128xf32>
      tpu.vector_store %arg13[%c0_27, %c0_28], %60 {strides = array<i32>} : memref<8x128xf32, #tpu.memory_space<vmem>>, vector<8x128xf32>,
    } else {
    }
    return
  }
  func.func @transform_0(%arg0: i32, %arg1: i32, %arg2: memref<1xi32, #tpu.memory_space<smem>>, %arg3: memref<1xi32, #tpu.memory_space<smem>>) -> (i32, i32) {
    %0 = arith.index_cast %arg0 : i32 to index
    %1 = memref.load %arg3[%0] : memref<1xi32, #tpu.memory_space<smem>>
    %c1_i32 = arith.constant 1 : i32
    %2 = arith.maxsi %1, %c1_i32 : i32
    %c1_i32_0 = arith.constant 1 : i32
    %3 = arith.subi %2, %c1_i32_0 : i32
    %4 = arith.index_cast %arg0 : i32 to index
    %5 = memref.load %arg2[%4] : memref<1xi32, #tpu.memory_space<smem>>
    %6 = arith.minsi %arg1, %3 : i32
    %7 = arith.addi %5, %6 : i32
    %c0_i32 = arith.constant 0 : i32
    %c0_i32_1 = arith.constant 0 : i32
    return %c0_i32, %7 : i32, i32
  }
  func.func @transform_1(%arg0: i32, %arg1: i32, %arg2: memref<1xi32, #tpu.memory_space<smem>>, %arg3: memref<1xi32, #tpu.memory_space<smem>>) -> (i32, i32) {
    %0 = arith.index_cast %arg0 : i32 to index
    %1 = memref.load %arg3[%0] : memref<1xi32, #tpu.memory_space<smem>>
    %c1_i32 = arith.constant 1 : i32
    %2 = arith.maxsi %1, %c1_i32 : i32
    %c1_i32_0 = arith.constant 1 : i32
    %3 = arith.subi %2, %c1_i32_0 : i32
    %4 = arith.index_cast %arg0 : i32 to index
    %5 = memref.load %arg2[%4] : memref<1xi32, #tpu.memory_space<smem>>
    %6 = arith.minsi %arg1, %3 : i32
    %7 = arith.addi %5, %6 : i32
    %c0_i32 = arith.constant 0 : i32
    %c0_i32_1 = arith.constant 0 : i32
    return %7, %c0_i32 : i32, i32
  }
  func.func @transform_2(%arg0: i32, %arg1: i32, %arg2: memref<1xi32, #tpu.memory_space<smem>>, %arg3: memref<1xi32, #tpu.memory_space<smem>>) -> (i32, i32) {
    %c0_i32 = arith.constant 0 : i32
    %c0_i32_0 = arith.constant 0 : i32
    return %arg0, %c0_i32 : i32, i32
  }
  func.func @transform_3(%arg0: i32, %arg1: i32, %arg2: memref<1xi32, #tpu.memory_space<smem>>, %arg3: memref<1xi32, #tpu.memory_space<smem>>) -> (i32, i32) {
    %c0_i32 = arith.constant 0 : i32
    %c0_i32_0 = arith.constant 0 : i32
    %c0_i32_1 = arith.constant 0 : i32
    return %c0_i32, %c0_i32_0 : i32, i32
  }
  func.func @transform_4(%arg0: i32, %arg1: i32, %arg2: memref<1xi32, #tpu.memory_space<smem>>, %arg3: memref<1xi32, #tpu.memory_space<smem>>) -> (i32, i32) {
    %c0_i32 = arith.constant 0 : i32
    %c0_i32_0 = arith.constant 0 : i32
    %c0_i32_1 = arith.constant 0 : i32
    return %c0_i32, %c0_i32_0 : i32, i32
  }
  func.func @transform_5(%arg0: i32, %arg1: i32, %arg2: memref<1xi32, #tpu.memory_space<smem>>, %arg3: memref<1xi32, #tpu.memory_space<smem>>) -> (i32, i32) {
    %c0_i32 = arith.constant 0 : i32
    %c0_i32_0 = arith.constant 0 : i32
    %c0_i32_1 = arith.constant 0 : i32
    return %c0_i32, %c0_i32_0 : i32, i32
  }
  func.func @transform_6(%arg0: i32, %arg1: i32, %arg2: memref<1xi32, #tpu.memory_space<smem>>, %arg3: memref<1xi32, #tpu.memory_space<smem>>) -> (i32, i32) {
    %c0_i32 = arith.constant 0 : i32
    %c0_i32_0 = arith.constant 0 : i32
    %c0_i32_1 = arith.constant 0 : i32
    return %c0_i32, %c0_i32_0 : i32, i32
  }
  func.func @transform_7(%arg0: i32, %arg1: i32, %arg2: memref<1xi32, #tpu.memory_space<smem>>, %arg3: memref<1xi32, #tpu.memory_space<smem>>) -> (i32, i32) {
    %c0_i32 = arith.constant 0 : i32
    %c0_i32_0 = arith.constant 0 : i32
    %c0_i32_1 = arith.constant 0 : i32
    return %c0_i32, %c0_i32_0 : i32, i32
  }
  func.func @transform_8(%arg0: i32, %arg1: i32, %arg2: memref<1xi32, #tpu.memory_space<smem>>, %arg3: memref<1xi32, #tpu.memory_space<smem>>) -> (i32, i32) {
    %c0_i32 = arith.constant 0 : i32
    %c0_i32_0 = arith.constant 0 : i32
    %c0_i32_1 = arith.constant 0 : i32
    return %c0_i32, %c0_i32_0 : i32, i32
  }
  func.func @transform_9(%arg0: i32, %arg1: i32, %arg2: memref<1xi32, #tpu.memory_space<smem>>, %arg3: memref<1xi32, #tpu.memory_space<smem>>) -> (i32, i32) {
    %c0_i32 = arith.constant 0 : i32
    %c0_i32_0 = arith.constant 0 : i32
    return %arg0, %c0_i32 : i32, i32
  }
}

module attributes {stable_mosaic.version = 11 : i64} {
  func.func @_inner_gnn_kernel(%arg0: i32, %arg1: i32, %arg2: memref<1xi32, #tpu.memory_space<smem>>, %arg3: memref<1xi32, #tpu.memory_space<smem>>, %arg4: memref<1x128xi32, #tpu.memory_space<vmem>>, %arg5: memref<128x32xbf16, #tpu.memory_space<vmem>>, %arg6: memref<8x128xf32, #tpu.memory_space<vmem>>, %arg7: memref<32x128xbf16, #tpu.memory_space<vmem>>, %arg8: memref<1x128xf32, #tpu.memory_space<vmem>>, %arg9: memref<128x128xbf16, #tpu.memory_space<vmem>>, %arg10: memref<1x128xf32, #tpu.memory_space<vmem>>, %arg11: memref<1x128xf32, #tpu.memory_space<vmem>>, %arg12: memref<1x128xf32, #tpu.memory_space<vmem>>, %arg13: memref<8x128xf32, #tpu.memory_space<vmem>>, %arg14: memref<8x32xf32, #tpu.memory_space<vmem>>) attributes {dimension_semantics = [#tpu.dimension_semantics<parallel>, #tpu.dimension_semantics<arbitrary>], iteration_bounds = array<i64: 1, 1>, scalar_prefetch = 2 : i64, scratch_operands = 1 : i64, tpu.core_type = #tpu.core_type<tc>, window_params = [{transform_indices = @transform_0, window_bounds = array<i64: 1, 128>}, {transform_indices = @transform_1, window_bounds = array<i64: 128, 32>}, {transform_indices = @transform_2, window_bounds = array<i64: 8, 128>}, {pipeline_mode = #tpu.pipeline_mode<synchronous>, transform_indices = @transform_3, window_bounds = array<i64: 32, 128>}, {pipeline_mode = #tpu.pipeline_mode<synchronous>, transform_indices = @transform_4, window_bounds = array<i64: 1, 128>}, {pipeline_mode = #tpu.pipeline_mode<synchronous>, transform_indices = @transform_5, window_bounds = array<i64: 128, 128>}, {pipeline_mode = #tpu.pipeline_mode<synchronous>, transform_indices = @transform_6, window_bounds = array<i64: 1, 128>}, {pipeline_mode = #tpu.pipeline_mode<synchronous>, transform_indices = @transform_7, window_bounds = array<i64: 1, 128>}, {pipeline_mode = #tpu.pipeline_mode<synchronous>, transform_indices = @transform_8, window_bounds = array<i64: 1, 128>}, {transform_indices = @transform_9, window_bounds = array<i64: 8, 128>}]} {
    %c0_i32 = arith.constant 0 : i32
    %0 = arith.cmpi eq, %arg1, %c0_i32 : i32
    %1 = arith.extui %0 : i1 to i32
    %c0_i32_0 = arith.constant 0 : i32
    %2 = arith.cmpi ne, %1, %c0_i32_0 : i32
    scf.if %2 {
      %cst = arith.constant 0.000000e+00 : f32
      %11 = vector.broadcast %cst : f32 to vector<8x32xf32>
      %c0 = arith.constant 0 : index
      %c0_4 = arith.constant 0 : index
      %12 = vector.load %arg14[%c0, %c0_4] : memref<8x32xf32, #tpu.memory_space<vmem>>, vector<8x32xf32>
      tpu.vector_store %arg14[%c0, %c0_4], %11 {strides = array<i32>} : memref<8x32xf32, #tpu.memory_space<vmem>>, vector<8x32xf32>,
    } else {
    }
    %3 = arith.index_cast %arg0 : i32 to index
    %4 = memref.load %arg3[%3] : memref<1xi32, #tpu.memory_space<smem>>
    %5 = arith.cmpi slt, %arg1, %4 : i32
    %6 = arith.extui %5 : i1 to i32
    %c0_i32_1 = arith.constant 0 : i32
    %7 = arith.cmpi ne, %6, %c0_i32_1 : i32
    scf.if %7 {
      %11 = tpu.iota {dimensions = array<i32: 0>} : vector<8x128xi32>
      %c0 = arith.constant 0 : index
      %c0_4 = arith.constant 0 : index
      %12 = vector.load %arg4[%c0, %c0_4] : memref<1x128xi32, #tpu.memory_space<vmem>>, vector<1x128xi32>
      %c8_i32 = arith.constant 8 : i32
      %13 = arith.muli %arg0, %c8_i32 : i32
      %14 = vector.broadcast %13 : i32 to vector<1x128xi32>
      %15 = arith.subi %12, %14 : vector<1x128xi32>
      %16 = vector.broadcast %15 : vector<1x128xi32> to vector<8x128xi32>
      %17 = arith.cmpi eq, %11, %16 : vector<8x128xi32>
      %18 = arith.extui %17 : vector<8x128xi1> to vector<8x128xi32>
      %19 = arith.sitofp %18 : vector<8x128xi32> to vector<8x128xf32>
      %20 = arith.truncf %19 : vector<8x128xf32> to vector<8x128xbf16>
      %c0_5 = arith.constant 0 : index
      %c0_6 = arith.constant 0 : index
      %21 = vector.load %arg14[%c0_5, %c0_6] : memref<8x32xf32, #tpu.memory_space<vmem>>, vector<8x32xf32>
      %c0_7 = arith.constant 0 : index
      %c0_8 = arith.constant 0 : index
      %22 = vector.load %arg5[%c0_7, %c0_8] : memref<128x32xbf16, #tpu.memory_space<vmem>>, vector<128x32xbf16>
      %cst = arith.constant dense<0.000000e+00> : vector<8x32xf32>
      %23 = tpu.matmul %20, %22, %cst {dimension_numbers = #tpu.dot_dimension_numbers<[1], [0], [0], [1], [0, 0, 1, 1], [], []>} : vector<8x128xbf16>, vector<128x32xbf16>, vector<8x32xf32> -> vector<8x32xf32>
      %24 = arith.addf %21, %23 : vector<8x32xf32>
      %c0_9 = arith.constant 0 : index
      %c0_10 = arith.constant 0 : index
      %25 = vector.load %arg14[%c0_9, %c0_10] : memref<8x32xf32, #tpu.memory_space<vmem>>, vector<8x32xf32>
      tpu.vector_store %arg14[%c0_9, %c0_10], %24 {strides = array<i32>} : memref<8x32xf32, #tpu.memory_space<vmem>>, vector<8x32xf32>,
    } else {
    }
    %c0_i32_2 = arith.constant 0 : i32
    %8 = arith.cmpi eq, %arg1, %c0_i32_2 : i32
    %9 = arith.extui %8 : i1 to i32
    %c0_i32_3 = arith.constant 0 : i32
    %10 = arith.cmpi ne, %9, %c0_i32_3 : i32
    scf.if %10 {
      %c0 = arith.constant 0 : index
      %c0_4 = arith.constant 0 : index
      %11 = vector.load %arg14[%c0, %c0_4] : memref<8x32xf32, #tpu.memory_space<vmem>>, vector<8x32xf32>
      %12 = arith.truncf %11 : vector<8x32xf32> to vector<8x32xbf16>
      %c0_5 = arith.constant 0 : index
      %c0_6 = arith.constant 0 : index
      %13 = vector.load %arg7[%c0_5, %c0_6] : memref<32x128xbf16, #tpu.memory_space<vmem>>, vector<32x128xbf16>
      %cst = arith.constant dense<0.000000e+00> : vector<8x128xf32>
      %14 = tpu.matmul %12, %13, %cst {dimension_numbers = #tpu.dot_dimension_numbers<[1], [0], [0], [1], [0, 0, 1, 1], [], []>} : vector<8x32xbf16>, vector<32x128xbf16>, vector<8x128xf32> -> vector<8x128xf32>
      %c0_7 = arith.constant 0 : index
      %c0_8 = arith.constant 0 : index
      %15 = vector.load %arg8[%c0_7, %c0_8] : memref<1x128xf32, #tpu.memory_space<vmem>>, vector<1x128xf32>
      %16 = vector.broadcast %15 : vector<1x128xf32> to vector<8x128xf32>
      %17 = arith.addf %14, %16 : vector<8x128xf32>
      %cst_9 = arith.constant 0.000000e+00 : f32
      %18 = vector.broadcast %cst_9 : f32 to vector<8x128xf32>
      %19 = arith.maximumf %17, %18 : vector<8x128xf32>
      %20 = arith.truncf %19 : vector<8x128xf32> to vector<8x128xbf16>
      %c0_10 = arith.constant 0 : index
      %c0_11 = arith.constant 0 : index
      %21 = vector.load %arg9[%c0_10, %c0_11] : memref<128x128xbf16, #tpu.memory_space<vmem>>, vector<128x128xbf16>
      %cst_12 = arith.constant dense<0.000000e+00> : vector<8x128xf32>
      %22 = tpu.matmul %20, %21, %cst_12 {dimension_numbers = #tpu.dot_dimension_numbers<[1], [0], [0], [1], [0, 0, 1, 1], [], []>} : vector<8x128xbf16>, vector<128x128xbf16>, vector<8x128xf32> -> vector<8x128xf32>
      %c0_13 = arith.constant 0 : index
      %c0_14 = arith.constant 0 : index
      %23 = vector.load %arg10[%c0_13, %c0_14] : memref<1x128xf32, #tpu.memory_space<vmem>>, vector<1x128xf32>
      %24 = vector.broadcast %23 : vector<1x128xf32> to vector<8x128xf32>
      %25 = arith.addf %22, %24 : vector<8x128xf32>
      %26 = tpu.iota {dimensions = array<i32: 1>} : vector<1x128xi32>
      %c32_i32 = arith.constant 32 : i32
      %27 = vector.broadcast %c32_i32 : i32 to vector<1x128xi32>
      %28 = arith.cmpi slt, %26, %27 : vector<1x128xi32>
      %29 = arith.extui %28 : vector<1x128xi1> to vector<1x128xi32>
      %30 = arith.sitofp %29 : vector<1x128xi32> to vector<1x128xf32>
      %31 = vector.broadcast %30 : vector<1x128xf32> to vector<8x128xf32>
      %32 = arith.mulf %25, %31 : vector<8x128xf32>
      %cst_15 = arith.constant dense<0.000000e+00> : vector<8xf32>
      %33 = vector.multi_reduction <add>, %32, %cst_15 [1] : vector<8x128xf32> to vector<8xf32>
      %34 = vector.shape_cast %33 : vector<8xf32> to vector<8x1xf32>
      %cst_16 = arith.constant 3.125000e-02 : f32
      %35 = vector.broadcast %cst_16 : f32 to vector<8x1xf32>
      %36 = arith.mulf %34, %35 : vector<8x1xf32>
      %37 = vector.broadcast %36 : vector<8x1xf32> to vector<8x128xf32>
      %38 = arith.subf %32, %37 : vector<8x128xf32>
      %39 = vector.broadcast %30 : vector<1x128xf32> to vector<8x128xf32>
      %40 = arith.mulf %38, %39 : vector<8x128xf32>
      %41 = arith.mulf %40, %40 : vector<8x128xf32>
      %cst_17 = arith.constant dense<0.000000e+00> : vector<8xf32>
      %42 = vector.multi_reduction <add>, %41, %cst_17 [1] : vector<8x128xf32> to vector<8xf32>
      %43 = vector.shape_cast %42 : vector<8xf32> to vector<8x1xf32>
      %cst_18 = arith.constant 3.125000e-02 : f32
      %44 = vector.broadcast %cst_18 : f32 to vector<8x1xf32>
      %45 = arith.mulf %43, %44 : vector<8x1xf32>
      %cst_19 = arith.constant 9.99999974E-6 : f32
      %46 = vector.broadcast %cst_19 : f32 to vector<8x1xf32>
      %47 = arith.addf %45, %46 : vector<8x1xf32>
      %48 = math.rsqrt %47 : vector<8x1xf32>
      %49 = vector.broadcast %48 : vector<8x1xf32> to vector<8x128xf32>
      %50 = arith.mulf %40, %49 : vector<8x128xf32>
      %c0_20 = arith.constant 0 : index
      %c0_21 = arith.constant 0 : index
      %51 = vector.load %arg11[%c0_20, %c0_21] : memref<1x128xf32, #tpu.memory_space<vmem>>, vector<1x128xf32>
      %52 = vector.broadcast %51 : vector<1x128xf32> to vector<8x128xf32>
      %53 = arith.mulf %50, %52 : vector<8x128xf32>
      %c0_22 = arith.constant 0 : index
      %c0_23 = arith.constant 0 : index
      %54 = vector.load %arg12[%c0_22, %c0_23] : memref<1x128xf32, #tpu.memory_space<vmem>>, vector<1x128xf32>
      %55 = vector.broadcast %54 : vector<1x128xf32> to vector<8x128xf32>
      %56 = arith.addf %53, %55 : vector<8x128xf32>
      %cst_24 = arith.constant 0.000000e+00 : f32
      %57 = vector.broadcast %cst_24 : f32 to vector<8x128xf32>
      %58 = arith.maximumf %56, %57 : vector<8x128xf32>
      %c0_25 = arith.constant 0 : index
      %c0_26 = arith.constant 0 : index
      %59 = vector.load %arg6[%c0_25, %c0_26] : memref<8x128xf32, #tpu.memory_space<vmem>>, vector<8x128xf32>
      %60 = arith.addf %58, %59 : vector<8x128xf32>
      %c0_27 = arith.constant 0 : index
      %c0_28 = arith.constant 0 : index
      %61 = vector.load %arg13[%c0_27, %c0_28] : memref<8x128xf32, #tpu.memory_space<vmem>>, vector<8x128xf32>
      tpu.vector_store %arg13[%c0_27, %c0_28], %60 {strides = array<i32>} : memref<8x128xf32, #tpu.memory_space<vmem>>, vector<8x128xf32>,
    } else {
    }
    return
  }
  func.func @transform_0(%arg0: i32, %arg1: i32, %arg2: memref<1xi32, #tpu.memory_space<smem>>, %arg3: memref<1xi32, #tpu.memory_space<smem>>) -> (i32, i32) {
    %0 = arith.index_cast %arg0 : i32 to index
    %1 = memref.load %arg3[%0] : memref<1xi32, #tpu.memory_space<smem>>
    %c1_i32 = arith.constant 1 : i32
    %2 = arith.maxsi %1, %c1_i32 : i32
    %c1_i32_0 = arith.constant 1 : i32
    %3 = arith.subi %2, %c1_i32_0 : i32
    %4 = arith.index_cast %arg0 : i32 to index
    %5 = memref.load %arg2[%4] : memref<1xi32, #tpu.memory_space<smem>>
    %6 = arith.minsi %arg1, %3 : i32
    %7 = arith.addi %5, %6 : i32
    %c0_i32 = arith.constant 0 : i32
    %c0_i32_1 = arith.constant 0 : i32
    return %c0_i32, %7 : i32, i32
  }
  func.func @transform_1(%arg0: i32, %arg1: i32, %arg2: memref<1xi32, #tpu.memory_space<smem>>, %arg3: memref<1xi32, #tpu.memory_space<smem>>) -> (i32, i32) {
    %0 = arith.index_cast %arg0 : i32 to index
    %1 = memref.load %arg3[%0] : memref<1xi32, #tpu.memory_space<smem>>
    %c1_i32 = arith.constant 1 : i32
    %2 = arith.maxsi %1, %c1_i32 : i32
    %c1_i32_0 = arith.constant 1 : i32
    %3 = arith.subi %2, %c1_i32_0 : i32
    %4 = arith.index_cast %arg0 : i32 to index
    %5 = memref.load %arg2[%4] : memref<1xi32, #tpu.memory_space<smem>>
    %6 = arith.minsi %arg1, %3 : i32
    %7 = arith.addi %5, %6 : i32
    %c0_i32 = arith.constant 0 : i32
    %c0_i32_1 = arith.constant 0 : i32
    return %7, %c0_i32 : i32, i32
  }
  func.func @transform_2(%arg0: i32, %arg1: i32, %arg2: memref<1xi32, #tpu.memory_space<smem>>, %arg3: memref<1xi32, #tpu.memory_space<smem>>) -> (i32, i32) {
    %c0_i32 = arith.constant 0 : i32
    %c0_i32_0 = arith.constant 0 : i32
    return %arg0, %c0_i32 : i32, i32
  }
  func.func @transform_3(%arg0: i32, %arg1: i32, %arg2: memref<1xi32, #tpu.memory_space<smem>>, %arg3: memref<1xi32, #tpu.memory_space<smem>>) -> (i32, i32) {
    %c0_i32 = arith.constant 0 : i32
    %c0_i32_0 = arith.constant 0 : i32
    %c0_i32_1 = arith.constant 0 : i32
    return %c0_i32, %c0_i32_0 : i32, i32
  }
  func.func @transform_4(%arg0: i32, %arg1: i32, %arg2: memref<1xi32, #tpu.memory_space<smem>>, %arg3: memref<1xi32, #tpu.memory_space<smem>>) -> (i32, i32) {
    %c0_i32 = arith.constant 0 : i32
    %c0_i32_0 = arith.constant 0 : i32
    %c0_i32_1 = arith.constant 0 : i32
    return %c0_i32, %c0_i32_0 : i32, i32
  }
  func.func @transform_5(%arg0: i32, %arg1: i32, %arg2: memref<1xi32, #tpu.memory_space<smem>>, %arg3: memref<1xi32, #tpu.memory_space<smem>>) -> (i32, i32) {
    %c0_i32 = arith.constant 0 : i32
    %c0_i32_0 = arith.constant 0 : i32
    %c0_i32_1 = arith.constant 0 : i32
    return %c0_i32, %c0_i32_0 : i32, i32
  }
  func.func @transform_6(%arg0: i32, %arg1: i32, %arg2: memref<1xi32, #tpu.memory_space<smem>>, %arg3: memref<1xi32, #tpu.memory_space<smem>>) -> (i32, i32) {
    %c0_i32 = arith.constant 0 : i32
    %c0_i32_0 = arith.constant 0 : i32
    %c0_i32_1 = arith.constant 0 : i32
    return %c0_i32, %c0_i32_0 : i32, i32
  }
  func.func @transform_7(%arg0: i32, %arg1: i32, %arg2: memref<1xi32, #tpu.memory_space<smem>>, %arg3: memref<1xi32, #tpu.memory_space<smem>>) -> (i32, i32) {
    %c0_i32 = arith.constant 0 : i32
    %c0_i32_0 = arith.constant 0 : i32
    %c0_i32_1 = arith.constant 0 : i32
    return %c0_i32, %c0_i32_0 : i32, i32
  }
  func.func @transform_8(%arg0: i32, %arg1: i32, %arg2: memref<1xi32, #tpu.memory_space<smem>>, %arg3: memref<1xi32, #tpu.memory_space<smem>>) -> (i32, i32) {
    %c0_i32 = arith.constant 0 : i32
    %c0_i32_0 = arith.constant 0 : i32
    %c0_i32_1 = arith.constant 0 : i32
    return %c0_i32, %c0_i32_0 : i32, i32
  }
  func.func @transform_9(%arg0: i32, %arg1: i32, %arg2: memref<1xi32, #tpu.memory_space<smem>>, %arg3: memref<1xi32, #tpu.memory_space<smem>>) -> (i32, i32) {
    %c0_i32 = arith.constant 0 : i32
    %c0_i32_0 = arith.constant 0 : i32
    return %arg0, %c0_i32 : i32, i32
  }
}

</mosaic_0001>

<llo_original>
// kernel: geognn_layer_forward.2
$region0: #{geognn_layer_forward.2}
  #allocation0 [shape = 'u32[]', space=smem, size = 0x4, offset = 0x4, fixed_abs, tag = 'smem constant byte address 0x4 - core index']
  #allocation1 [shape = 'u32[72,128]{1,0:T(1,128)}', space=vmem, size = 0x9000, scoped, tag = 'internal scratch']
  #allocation2 [shape = 'f32[8,32]{1,0:T(8,128)}', space=vmem, size = 0x1000, scoped, tag = 'scratch operand']
  #allocation3 [shape = 's32[1]{0}', space=sflag, size = 0x4, scoped, tag = 'scoped memory for geognn_layer_forward.2']
  #allocation4 [shape = 's32[1]{0:T(128)S(6)}', space=smem, size = 0x200, scoped, tag = 'prefetched SMEM operand 0']
  #allocation5 [shape = 's32[1]{0:T(128)S(6)}', space=smem, size = 0x200, scoped, tag = 'prefetched SMEM operand 1']
  %s0 = inlined_call_operand.<no memory space> [shape: s32[1], index: 0, kind: input, shape index: {}]
  %s1 = inlined_call_operand.<no memory space> [shape: s32[1], index: 1, kind: input, shape index: {}]
  %s2 = inlined_call_operand.vmem [shape: s32[1,128], index: 2, kind: input, shape index: {}]
  %s3 = inlined_call_operand.vmem [shape: bf16[128,32], index: 3, kind: input, shape index: {}]
  %s4 = inlined_call_operand.vmem [shape: f32[8,128], index: 4, kind: input, shape index: {}]
  %s5 = inlined_call_operand.vmem [shape: bf16[32,128], index: 5, kind: input, shape index: {}]
  %s6 = inlined_call_operand.vmem [shape: f32[1,128], index: 6, kind: input, shape index: {}]
  %s7 = inlined_call_operand.vmem [shape: bf16[128,128], index: 7, kind: input, shape index: {}]
  %s8 = inlined_call_operand.vmem [shape: f32[1,128], index: 8, kind: input, shape index: {}]
  %s9 = inlined_call_operand.vmem [shape: f32[1,128], index: 9, kind: input, shape index: {}]
  %s10 = inlined_call_operand.vmem [shape: f32[1,128], index: 10, kind: input, shape index: {}]
  %s11 = inlined_call_operand.hbm [shape: f32[8,128], index: 11, kind: output, shape index: {}]
  %s12 = sld [smem:[#allocation0]]
  $region58: #{geognn_layer_forward.2} parent=0
    _
  %s14 = ssub.s32 1, %s12
  %s15 = scalar_select 0, %s14, %s12
  %16 = sst [smem:[#allocation4]] %s0
  %17 = sst [smem:[#allocation5]] %s1
  $region1: #{geognn_layer_forward.2} parent=0
    #allocation6 [shape = 'u8[4096]{0}', space=vmem, size = 0x1000, scoped, tag = 'output window, operand 0, single buffered']
    #allocation7 [shape = 's32[1]{0}', space=sflag, size = 0x4, scoped, tag = 'scoped memory for geognn_layer_forward.2']
    %18 = vsyncpa [#allocation7], 0
    // Predicated region
    $region2: #{geognn_layer_forward.2} parent=1 // pred_check
      _
    $region3: #{geognn_layer_forward.2} parent=1 // pred_check_branch
      %20 = sbr.rel (0) target = $region5
    $region4: #{geognn_layer_forward.2} parent=1 // pred_region
      %s21 = sld [smem:[#allocation5]]
      %p22 = scmp.gt.s32.totalorder %s21, 1
      %s23 = scalar_select %p22, %s21, 1
      %s24 = ssub.s32 %s23, 1
      %s25 = sld [smem:[#allocation4]]
      %p26 = scmp.lt.s32.totalorder 0, %s24
      %s27 = scalar_select %p26, 0, %s24
      %s28 = sadd.s32 %s25, %s27
      %p29 = scmp.lt.s32.totalorder %s28, 0
      %s30 = scalar_select %p29, %s28, 0
      %s31 = scalar_lea.vmem %s2, %s30
      %s32 = sld [smem:[#allocation5]]
      %p33 = scmp.gt.s32.totalorder %s32, 1
      %s34 = scalar_select %p33, %s32, 1
      %s35 = ssub.s32 %s34, 1
      %s36 = sld [smem:[#allocation4]]
      %p37 = scmp.lt.s32.totalorder 0, %s35
      %s38 = scalar_select %p37, 0, %s35
      %s39 = sadd.s32 %s36, %s38
    $region5: #{geognn_layer_forward.2} parent=1 // pred_fallthru
      _
    // Predicated region
    $region6: #{geognn_layer_forward.2} parent=1 // pred_check
      _
    $region7: #{geognn_layer_forward.2} parent=1 // pred_check_branch
      %41 = sbr.rel (0) target = $region9
    $region8: #{geognn_layer_forward.2} parent=1 // pred_region
      %s42 = sld [smem:[#allocation5]]
      %p43 = scmp.gt.s32.totalorder %s42, 1
      %s44 = scalar_select %p43, %s42, 1
      %s45 = ssub.s32 %s44, 1
      %s46 = sld [smem:[#allocation4]]
      %p47 = scmp.lt.s32.totalorder 0, %s45
      %s48 = scalar_select %p47, 0, %s45
      %s49 = sadd.s32 %s46, %s48
      %s50 = smul.u32 16, %s49
      %p51 = scmp.lt.s32.totalorder %s50, 15
      %s52 = scalar_select %p51, %s50, 15
      %s53 = smul.addr %s52, 4
      %s54 = scalar_lea.vmem %s3, %s53
      %s55 = sld [smem:[#allocation5]]
      %p56 = scmp.gt.s32.totalorder %s55, 1
      %s57 = scalar_select %p56, %s55, 1
      %s58 = ssub.s32 %s57, 1
      %s59 = sld [smem:[#allocation4]]
      %p60 = scmp.lt.s32.totalorder 0, %s58
      %s61 = scalar_select %p60, 0, %s58
      %s62 = sadd.s32 %s59, %s61
      %s63 = smul.u32 16, %s62
    $region9: #{geognn_layer_forward.2} parent=1 // pred_fallthru
      _
    // Predicated region
    $region10: #{geognn_layer_forward.2} parent=1 // pred_check
      _
    $region11: #{geognn_layer_forward.2} parent=1 // pred_check_branch
      %65 = sbr.rel (0) target = $region13
    $region12: #{geognn_layer_forward.2} parent=1 // pred_region
      _
    $region13: #{geognn_layer_forward.2} parent=1 // pred_fallthru
      _
    // Predicated region
    $region14: #{geognn_layer_forward.2} parent=1 // pred_check
      _
    $region15: #{geognn_layer_forward.2} parent=1 // pred_check_branch
      %67 = sbr.rel (0) target = $region17
    $region16: #{geognn_layer_forward.2} parent=1 // pred_region
      _
    $region17: #{geognn_layer_forward.2} parent=1 // pred_fallthru
      _
    // Predicated region
    $region18: #{geognn_layer_forward.2} parent=1 // pred_check
      _
    $region19: #{geognn_layer_forward.2} parent=1 // pred_check_branch
      %69 = sbr.rel (0) target = $region21
    $region20: #{geognn_layer_forward.2} parent=1 // pred_region
      _
    $region21: #{geognn_layer_forward.2} parent=1 // pred_fallthru
      _
    // Predicated region
    $region22: #{geognn_layer_forward.2} parent=1 // pred_check
      _
    $region23: #{geognn_layer_forward.2} parent=1 // pred_check_branch
      %71 = sbr.rel (0) target = $region25
    $region24: #{geognn_layer_forward.2} parent=1 // pred_region
      _
    $region25: #{geognn_layer_forward.2} parent=1 // pred_fallthru
      _
    // Predicated region
    $region26: #{geognn_layer_forward.2} parent=1 // pred_check
      _
    $region27: #{geognn_layer_forward.2} parent=1 // pred_check_branch
      %73 = sbr.rel (0) target = $region29
    $region28: #{geognn_layer_forward.2} parent=1 // pred_region
      _
    $region29: #{geognn_layer_forward.2} parent=1 // pred_fallthru
      _
    // Predicated region
    $region30: #{geognn_layer_forward.2} parent=1 // pred_check
      _
    $region31: #{geognn_layer_forward.2} parent=1 // pred_check_branch
      %75 = sbr.rel (0) target = $region33
    $region32: #{geognn_layer_forward.2} parent=1 // pred_region
      _
    $region33: #{geognn_layer_forward.2} parent=1 // pred_fallthru
      _
    // Predicated region
    $region34: #{geognn_layer_forward.2} parent=1 // pred_check
      _
    $region35: #{geognn_layer_forward.2} parent=1 // pred_check_branch
      %77 = sbr.rel (0) target = $region37
    $region36: #{geognn_layer_forward.2} parent=1 // pred_region
      _
    $region37: #{geognn_layer_forward.2} parent=1 // pred_fallthru
      _
    %s78 = sld [smem:[#allocation5]]
    %p79 = scmp.gt.s32.totalorder %s78, 1
    %s80 = scalar_select %p79, %s78, 1
    %s81 = ssub.s32 %s80, 1
    %s82 = sld [smem:[#allocation4]]
    %p83 = scmp.lt.s32.totalorder 0, %s81
    %s84 = scalar_select %p83, 0, %s81
    %s85 = sadd.s32 %s82, %s84
    %p86 = scmp.lt.s32.totalorder %s85, 0
    %s87 = scalar_select %p86, %s85, 0
    %s88 = scalar_lea.vmem %s2, %s87
    %s89 = sld [smem:[#allocation5]]
    %p90 = scmp.gt.s32.totalorder %s89, 1
    %s91 = scalar_select %p90, %s89, 1
    %s92 = ssub.s32 %s91, 1
    %s93 = sld [smem:[#allocation4]]
    %p94 = scmp.lt.s32.totalorder 0, %s92
    %s95 = scalar_select %p94, 0, %s92
    %s96 = sadd.s32 %s93, %s95
    %s97 = smul.u32 16, %s96
    %p98 = scmp.lt.s32.totalorder %s97, 15
    %s99 = scalar_select %p98, %s97, 15
    %s100 = smul.addr %s99, 4
    %s101 = scalar_lea.vmem %s3, %s100
    %s102 = sld [smem:[#allocation5]]
    %p103 = scmp.gt.s32.totalorder %s102, 1
    %s104 = scalar_select %p103, %s102, 1
    %s105 = ssub.s32 %s104, 1
    %s106 = sld [smem:[#allocation4]]
    %p107 = scmp.lt.s32.totalorder 0, %s105
    %s108 = scalar_select %p107, 0, %s105
    %s109 = sadd.s32 %s106, %s108
    %p110 = scmp.lt.s32.totalorder %s109, 0
    %s111 = scalar_select %p110, %s109, 0
    %s112 = scalar_lea.vmem %s2, %s111
    %s113 = sld [smem:[#allocation5]]
    %p114 = scmp.gt.s32.totalorder %s113, 1
    %s115 = scalar_select %p114, %s113, 1
    %s116 = ssub.s32 %s115, 1
    %s117 = sld [smem:[#allocation4]]
    %p118 = scmp.lt.s32.totalorder 0, %s116
    %s119 = scalar_select %p118, 0, %s116
    %s120 = sadd.s32 %s117, %s119
    %s121 = sld [smem:[#allocation5]]
    %p122 = scmp.gt.s32.totalorder %s121, 1
    %s123 = scalar_select %p122, %s121, 1
    %s124 = ssub.s32 %s123, 1
    %s125 = sld [smem:[#allocation4]]
    %p126 = scmp.lt.s32.totalorder 0, %s124
    %s127 = scalar_select %p126, 0, %s124
    %s128 = sadd.s32 %s125, %s127
    %s129 = smul.u32 16, %s128
    %p130 = scmp.lt.s32.totalorder %s129, 15
    %s131 = scalar_select %p130, %s129, 15
    %s132 = smul.addr %s131, 4
    %s133 = scalar_lea.vmem %s3, %s132
    %s134 = sld [smem:[#allocation5]]
    %p135 = scmp.gt.s32.totalorder %s134, 1
    %s136 = scalar_select %p135, %s134, 1
    %s137 = ssub.s32 %s136, 1
    %s138 = sld [smem:[#allocation4]]
    %p139 = scmp.lt.s32.totalorder 0, %s137
    %s140 = scalar_select %p139, 0, %s137
    %s141 = sadd.s32 %s138, %s140
    %s142 = smul.u32 16, %s141
    %p144 = scmp.eq.s32.totalorder 0, 0
    // Predicated region
    $region38: #{geognn_layer_forward.2} parent=1 // pred_check
      %p145 = pneg %p144
    $region39: #{geognn_layer_forward.2} parent=1 // pred_check_branch
      %147 = sbr.rel (%p145) target = $region41
    $region40: #{geognn_layer_forward.2} parent=1 // pred_region
      %vm148 = vcmask 261120
      %149 = vst.msk [vmem:[#allocation2] sm:$0xff] %vm148, 0.0
    $region41: #{geognn_layer_forward.2} parent=1 // pred_fallthru
      _
    %s150 = sld [smem:[#allocation5]]
    %p151 = scmp.lt.s32.totalorder 0, %s150
    // Predicated region
    $region42: #{geognn_layer_forward.2} parent=1 // pred_check
      %p152 = pneg %p151
    $region43: #{geognn_layer_forward.2} parent=1 // pred_check_branch
      %154 = sbr.rel (%p152) target = $region45
    $region44: #{geognn_layer_forward.2} parent=1 // pred_region
      %v155 = vlaneseq
      %v156 = vshrl.u32 %v155, 7
      %v157 = vld [vmem:[%s112] sm:$0x1]
      %s158 = smul.u32 0, 8
      %v159 = vstv %s158
      %v160 = vsub.s32 %v157, %v159
      %v161 = vperm.slane %v160, 0
      %vm162 = vcmp.eq.s32.totalorder %v156, %v161
      %v163 = vsel %vm162, 1, 0
      %v164 = vcvt.s32.f32 %v163
      %v165 = vpack.c.bf16 %v164, %v164
      %v166 = vld [vmem:[#allocation2] sm:$0xff]
      %v167 = vld [vmem:[%s133] sm:$0xf]
      %v168 = vld [vmem:[%s133 + $0x4] sm:$0xf]
      %v169 = vld [vmem:[%s133 + $0x8] sm:$0xf]
      %v170 = vld [vmem:[%s133 + $0xc] sm:$0xf]
      %v171 = vld [vmem:[%s133 + $0x10] sm:$0xf]
      %v172 = vld [vmem:[%s133 + $0x14] sm:$0xf]
      %v173 = vld [vmem:[%s133 + $0x18] sm:$0xf]
      %v174 = vld [vmem:[%s133 + $0x1c] sm:$0xf]
      %v175 = vld [vmem:[%s133 + $0x20] sm:$0xf]
      %v176 = vld [vmem:[%s133 + $0x24] sm:$0xf]
      %v177 = vld [vmem:[%s133 + $0x28] sm:$0xf]
      %v178 = vld [vmem:[%s133 + $0x2c] sm:$0xf]
      %v179 = vld [vmem:[%s133 + $0x30] sm:$0xf]
      %v180 = vld [vmem:[%s133 + $0x34] sm:$0xf]
      %v181 = vld [vmem:[%s133 + $0x38] sm:$0xf]
      %v182 = vld [vmem:[%s133 + $0x3c] sm:$0xf]
      %v199 = vunpack.c.l.b16 %v167
      %v200 = vunpack.c.l.b16 %v168
      %v201 = vunpack.c.l.b16 %v169
      %v202 = vunpack.c.l.b16 %v170
      %v203 = vunpack.c.l.b16 %v171
      %v204 = vunpack.c.l.b16 %v172
      %v205 = vunpack.c.l.b16 %v173
      %v206 = vunpack.c.l.b16 %v174
      %v207 = vunpack.c.l.b16 %v175
      %v208 = vunpack.c.l.b16 %v176
      %v209 = vunpack.c.l.b16 %v177
      %v210 = vunpack.c.l.b16 %v178
      %v211 = vunpack.c.l.b16 %v179
      %v212 = vunpack.c.l.b16 %v180
      %v213 = vunpack.c.l.b16 %v181
      %v214 = vunpack.c.l.b16 %v182
      %v215 = vpack.c.b16 %v200, %v199
      %v216 = vpack.c.b16 %v202, %v201
      %v217 = vpack.c.b16 %v204, %v203
      %v218 = vpack.c.b16 %v206, %v205
      %v219 = vpack.c.b16 %v208, %v207
      %v220 = vpack.c.b16 %v210, %v209
      %v221 = vpack.c.b16 %v212, %v211
      %v222 = vpack.c.b16 %v214, %v213
      %231 = vmatpush.bf16.msra.mxu0 %v222
      %232 = vmatpush.bf16.msra.mxu0 %v221
      %233 = vmatpush.bf16.msra.mxu0 %v220
      %234 = vmatpush.bf16.msra.mxu0 %v219
      %235 = vmatpush.bf16.msra.mxu0 %v218
      %236 = vmatpush.bf16.msra.mxu0 %v217
      %237 = vmatpush.bf16.msra.mxu0 %v216
      %238 = vmatpush.bf16.msra.mxu0 %v215
      %239 = vmatmul.bf16.gmra.mxu0 %v165
      %v240 = vpop.f32.mrf.mxu0
      %v241 = vadd.f32 0.0, %v240
      %v242 = vpop.f32.mrf.mxu0
      %243 = vdwg.mxu0
      %v244 = vadd.f32 %v166, %v241
      %vm245 = vcmask 261120
      %246 = vst.msk [vmem:[#allocation2] sm:$0xff] %vm245, %v244
    $region45: #{geognn_layer_forward.2} parent=1 // pred_fallthru
      _
    // Predicated region
    $region46: #{geognn_layer_forward.2} parent=1 // pred_check
      %p247 = pneg %p144
    $region47: #{geognn_layer_forward.2} parent=1 // pred_check_branch
      %249 = sbr.rel (%p247) target = $region49
    $region48: #{geognn_layer_forward.2} parent=1 // pred_region
      %v250 = vld [vmem:[#allocation2] sm:$0xff]
      %v251 = vpack.c.bf16 %v250, %v250
      %v252 = vld [vmem:[%s5] sm:$0xf]
      %v253 = vld [vmem:[%s5 + $0x4] sm:$0xf]
      %v254 = vld [vmem:[%s5 + $0x8] sm:$0xf]
      %v255 = vld [vmem:[%s5 + $0xc] sm:$0xf]
      %v256 = vld [vmem:[%s6] sm:$0x1]
      %v258 = vperm.slane %v256, 0
      %v264 = vunpack.c.l.b16 %v252
      %v265 = vunpack.c.l.b16 %v253
      %v266 = vunpack.c.l.b16 %v254
      %v267 = vunpack.c.l.b16 %v255
      %v268 = vpack.c.b16 %v265, %v264
      %v269 = vpack.c.b16 %v267, %v266
      %vm272 = vcmask 261120
      %v274 = vsel %vm272, %v251, 0
      %276 = vmatpush.bf16.msra.mxu0 0
      %277 = vmatpush.bf16.msra.mxu0 0
      %278 = vmatpush.bf16.msra.mxu0 0
      %279 = vmatpush.bf16.msra.mxu0 0
      %280 = vmatpush.bf16.msra.mxu0 0
      %281 = vmatpush.bf16.msra.mxu0 0
      %282 = vmatpush.bf16.msra.mxu0 %v269
      %283 = vmatpush.bf16.msra.mxu0 %v268
      %284 = vmatmul.bf16.gmra.mxu0 %v274
      %v285 = vpop.f32.mrf.mxu0
      %v286 = vadd.f32 %v258, %v285
      %v287 = vpop.f32.mrf.mxu0
      %288 = vdwg.mxu0
      %v289 = vmax.f32 %v286, 0.0
      %v290 = vpack.c.bf16 %v289, %v289
      %v291 = vld [vmem:[%s7] sm:$0xf]
      %v292 = vld [vmem:[%s7 + $0x4] sm:$0xf]
      %v293 = vld [vmem:[%s7 + $0x8] sm:$0xf]
      %v294 = vld [vmem:[%s7 + $0xc] sm:$0xf]
      %v295 = vld [vmem:[%s7 + $0x10] sm:$0xf]
      %v296 = vld [vmem:[%s7 + $0x14] sm:$0xf]
      %v297 = vld [vmem:[%s7 + $0x18] sm:$0xf]
      %v298 = vld [vmem:[%s7 + $0x1c] sm:$0xf]
      %v299 = vld [vmem:[%s7 + $0x20] sm:$0xf]
      %v300 = vld [vmem:[%s7 + $0x24] sm:$0xf]
      %v301 = vld [vmem:[%s7 + $0x28] sm:$0xf]
      %v302 = vld [vmem:[%s7 + $0x2c] sm:$0xf]
      %v303 = vld [vmem:[%s7 + $0x30] sm:$0xf]
      %v304 = vld [vmem:[%s7 + $0x34] sm:$0xf]
      %v305 = vld [vmem:[%s7 + $0x38] sm:$0xf]
      %v306 = vld [vmem:[%s7 + $0x3c] sm:$0xf]
      %v307 = vld [vmem:[%s8] sm:$0x1]
      %v309 = vperm.slane %v307, 0
      %v327 = vunpack.c.l.b16 %v291
      %v328 = vunpack.c.l.b16 %v292
      %v329 = vunpack.c.l.b16 %v293
      %v330 = vunpack.c.l.b16 %v294
      %v331 = vunpack.c.l.b16 %v295
      %v332 = vunpack.c.l.b16 %v296
      %v333 = vunpack.c.l.b16 %v297
      %v334 = vunpack.c.l.b16 %v298
      %v335 = vunpack.c.l.b16 %v299
      %v336 = vunpack.c.l.b16 %v300
      %v337 = vunpack.c.l.b16 %v301
      %v338 = vunpack.c.l.b16 %v302
      %v339 = vunpack.c.l.b16 %v303
      %v340 = vunpack.c.l.b16 %v304
      %v341 = vunpack.c.l.b16 %v305
      %v342 = vunpack.c.l.b16 %v306
      %v343 = vpack.c.b16 %v328, %v327
      %v344 = vpack.c.b16 %v330, %v329
      %v345 = vpack.c.b16 %v332, %v331
      %v346 = vpack.c.b16 %v334, %v333
      %v347 = vpack.c.b16 %v336, %v335
      %v348 = vpack.c.b16 %v338, %v337
      %v349 = vpack.c.b16 %v340, %v339
      %v350 = vpack.c.b16 %v342, %v341
      %359 = vmatpush.bf16.msra.mxu0 %v350
      %360 = vmatpush.bf16.msra.mxu0 %v349
      %361 = vmatpush.bf16.msra.mxu0 %v348
      %362 = vmatpush.bf16.msra.mxu0 %v347
      %363 = vmatpush.bf16.msra.mxu0 %v346
      %364 = vmatpush.bf16.msra.mxu0 %v345
      %365 = vmatpush.bf16.msra.mxu0 %v344
      %366 = vmatpush.bf16.msra.mxu0 %v343
      %367 = vmatmul.bf16.gmra.mxu0 %v290
      %v368 = vpop.f32.mrf.mxu0
      %v369 = vadd.f32 %v309, %v368
      %v370 = vpop.f32.mrf.mxu0
      %371 = vdwg.mxu0
      %v372 = vlaneseq
      %v373 = vand.u32 %v372, 127
      %vm374 = vcmp.lt.s32.totalorder %v373, 32
      %v375 = vsel %vm374, 1, 0
      %v376 = vcvt.s32.f32 %v375
      %v377 = vmul.f32 %v369, %v376
      %378 = vadd.xlane.f32.xlu0 %v377
      %v379 = vpop.xlane.xlu0 %378
      %v380 = vmul.f32 %v379, 0.03125
      %v381 = vsub.f32 %v377, %v380
      %v382 = vmul.f32 %v381, %v376
      %v383 = vmul.f32 %v382, %v382
      %384 = vadd.xlane.f32.xlu0 %v383
      %v385 = vpop.xlane.xlu0 %384
      %v386 = vmul.f32 %v385, 0.03125
      %v387 = vadd.f32 %v386, 1e-05
      %v388 = vrsqrt.pop %v387
      %v389 = vmul.f32 %v388, %v387
      %v390 = vmul.f32 %v389, %v388
      %v391 = vmul.f32 0.5, %v390
      %v392 = vsub.f32 1.5, %v391
      %v393 = vmul.f32 %v388, %v392
      %vm394 = vweird.f32 %v387
      %vm395 = vweird.f32 %v388
      %vm396 = vmor %vm394, %vm395
      %v397 = vsel %vm396, %v388, %v393
      %v398 = vmul.f32 %v382, %v397
      %v399 = vld [vmem:[%s9] sm:$0x1]
      %v401 = vperm.slane %v399, 0
      %v403 = vmul.f32 %v398, %v401
      %v404 = vld [vmem:[%s10] sm:$0x1]
      %v406 = vperm.slane %v404, 0
      %v408 = vadd.f32 %v403, %v406
      %v409 = vmax.f32 %v408, 0.0
      %v410 = vld [vmem:[%s4] sm:$0xff]
      %v411 = vadd.f32 %v409, %v410
      %412 = vst [vmem:[#allocation6] sm:$0xff] %v411
    $region49: #{geognn_layer_forward.2} parent=1 // pred_fallthru
      _
    // Predicated region
    $region50: #{geognn_layer_forward.2} parent=1 // pred_check
      _
    $region51: #{geognn_layer_forward.2} parent=1 // pred_check_branch
      %414 = sbr.rel (0) target = $region53
    $region52: #{geognn_layer_forward.2} parent=1 // pred_region
      %416 = vsyncadd [#allocation7], 0
      %s418 = sshll.u32 [#allocation6], 4
      %s419 = int_to_ptr.vmem [resolvable:$true] %s418
      %s420 = sshll.u32 %s11, 4
      %s421 = int_to_ptr.hbm [resolvable:$true] %s420
      %423 = dma.vmem_to_hbm [thread:$0]  %s419, 128, %s421, [#allocation7]
    $region53: #{geognn_layer_forward.2} parent=1 // pred_fallthru
      _
    // Predicated region
    $region54: #{geognn_layer_forward.2} parent=1 // pred_check
      _
    $region55: #{geognn_layer_forward.2} parent=1 // pred_check_branch
      %425 = sbr.rel (0) target = $region57
    $region56: #{geognn_layer_forward.2} parent=1 // pred_region
      %427 = dma.done [#allocation7], 128
    $region57: #{geognn_layer_forward.2} parent=1 // pred_fallthru
      _
    %428 = vsyncpa [#allocation7], 1

// kernel: geognn_layer_forward.3
$region0: #{geognn_layer_forward.3}
  #allocation0 [shape = 'u32[]', space=smem, size = 0x4, offset = 0x4, fixed_abs, tag = 'smem constant byte address 0x4 - core index']
  #allocation1 [shape = 'u32[72,128]{1,0:T(1,128)}', space=vmem, size = 0x9000, scoped, tag = 'internal scratch']
  #allocation2 [shape = 'f32[8,32]{1,0:T(8,128)}', space=vmem, size = 0x1000, scoped, tag = 'scratch operand']
  #allocation3 [shape = 's32[1]{0}', space=sflag, size = 0x4, scoped, tag = 'scoped memory for geognn_layer_forward.3']
  #allocation4 [shape = 's32[1]{0:T(128)S(6)}', space=smem, size = 0x200, scoped, tag = 'prefetched SMEM operand 0']
  #allocation5 [shape = 's32[1]{0:T(128)S(6)}', space=smem, size = 0x200, scoped, tag = 'prefetched SMEM operand 1']
  %s0 = inlined_call_operand.<no memory space> [shape: s32[1], index: 0, kind: input, shape index: {}]
  %s1 = inlined_call_operand.<no memory space> [shape: s32[1], index: 1, kind: input, shape index: {}]
  %s2 = inlined_call_operand.vmem [shape: s32[1,128], index: 2, kind: input, shape index: {}]
  %s3 = inlined_call_operand.vmem [shape: bf16[128,32], index: 3, kind: input, shape index: {}]
  %s4 = inlined_call_operand.vmem [shape: f32[8,128], index: 4, kind: input, shape index: {}]
  %s5 = inlined_call_operand.vmem [shape: bf16[32,128], index: 5, kind: input, shape index: {}]
  %s6 = inlined_call_operand.vmem [shape: f32[1,128], index: 6, kind: input, shape index: {}]
  %s7 = inlined_call_operand.vmem [shape: bf16[128,128], index: 7, kind: input, shape index: {}]
  %s8 = inlined_call_operand.vmem [shape: f32[1,128], index: 8, kind: input, shape index: {}]
  %s9 = inlined_call_operand.vmem [shape: f32[1,128], index: 9, kind: input, shape index: {}]
  %s10 = inlined_call_operand.vmem [shape: f32[1,128], index: 10, kind: input, shape index: {}]
  %s11 = inlined_call_operand.vmem [shape: f32[8,128], index: 11, kind: output, shape index: {}]
  %s12 = sld [smem:[#allocation0]]
  $region58: #{geognn_layer_forward.3} parent=0
    _
  %s14 = ssub.s32 1, %s12
  %s15 = scalar_select 0, %s14, %s12
  %16 = sst [smem:[#allocation4]] %s0
  %17 = sst [smem:[#allocation5]] %s1
  // Predicated region
  $region2: #{geognn_layer_forward.3} parent=0 // pred_check
    _
  $region3: #{geognn_layer_forward.3} parent=0 // pred_check_branch
    %19 = sbr.rel (0) target = $region5
  $region4: #{geognn_layer_forward.3} parent=0 // pred_region
    %s20 = sld [smem:[#allocation5]]
    %p21 = scmp.gt.s32.totalorder %s20, 1
    %s22 = scalar_select %p21, %s20, 1
    %s23 = ssub.s32 %s22, 1
    %s24 = sld [smem:[#allocation4]]
    %p25 = scmp.lt.s32.totalorder 0, %s23
    %s26 = scalar_select %p25, 0, %s23
    %s27 = sadd.s32 %s24, %s26
    %p28 = scmp.lt.s32.totalorder %s27, 0
    %s29 = scalar_select %p28, %s27, 0
    %s30 = scalar_lea.vmem %s2, %s29
    %s31 = sld [smem:[#allocation5]]
    %p32 = scmp.gt.s32.totalorder %s31, 1
    %s33 = scalar_select %p32, %s31, 1
    %s34 = ssub.s32 %s33, 1
    %s35 = sld [smem:[#allocation4]]
    %p36 = scmp.lt.s32.totalorder 0, %s34
    %s37 = scalar_select %p36, 0, %s34
    %s38 = sadd.s32 %s35, %s37
  $region5: #{geognn_layer_forward.3} parent=0 // pred_fallthru
    _
  // Predicated region
  $region6: #{geognn_layer_forward.3} parent=0 // pred_check
    _
  $region7: #{geognn_layer_forward.3} parent=0 // pred_check_branch
    %40 = sbr.rel (0) target = $region9
  $region8: #{geognn_layer_forward.3} parent=0 // pred_region
    %s41 = sld [smem:[#allocation5]]
    %p42 = scmp.gt.s32.totalorder %s41, 1
    %s43 = scalar_select %p42, %s41, 1
    %s44 = ssub.s32 %s43, 1
    %s45 = sld [smem:[#allocation4]]
    %p46 = scmp.lt.s32.totalorder 0, %s44
    %s47 = scalar_select %p46, 0, %s44
    %s48 = sadd.s32 %s45, %s47
    %s49 = smul.u32 16, %s48
    %p50 = scmp.lt.s32.totalorder %s49, 15
    %s51 = scalar_select %p50, %s49, 15
    %s52 = smul.addr %s51, 4
    %s53 = scalar_lea.vmem %s3, %s52
    %s54 = sld [smem:[#allocation5]]
    %p55 = scmp.gt.s32.totalorder %s54, 1
    %s56 = scalar_select %p55, %s54, 1
    %s57 = ssub.s32 %s56, 1
    %s58 = sld [smem:[#allocation4]]
    %p59 = scmp.lt.s32.totalorder 0, %s57
    %s60 = scalar_select %p59, 0, %s57
    %s61 = sadd.s32 %s58, %s60
    %s62 = smul.u32 16, %s61
  $region9: #{geognn_layer_forward.3} parent=0 // pred_fallthru
    _
  // Predicated region
  $region10: #{geognn_layer_forward.3} parent=0 // pred_check
    _
  $region11: #{geognn_layer_forward.3} parent=0 // pred_check_branch
    %64 = sbr.rel (0) target = $region13
  $region12: #{geognn_layer_forward.3} parent=0 // pred_region
    _
  $region13: #{geognn_layer_forward.3} parent=0 // pred_fallthru
    _
  // Predicated region
  $region14: #{geognn_layer_forward.3} parent=0 // pred_check
    _
  $region15: #{geognn_layer_forward.3} parent=0 // pred_check_branch
    %66 = sbr.rel (0) target = $region17
  $region16: #{geognn_layer_forward.3} parent=0 // pred_region
    _
  $region17: #{geognn_layer_forward.3} parent=0 // pred_fallthru
    _
  // Predicated region
  $region18: #{geognn_layer_forward.3} parent=0 // pred_check
    _
  $region19: #{geognn_layer_forward.3} parent=0 // pred_check_branch
    %68 = sbr.rel (0) target = $region21
  $region20: #{geognn_layer_forward.3} parent=0 // pred_region
    _
  $region21: #{geognn_layer_forward.3} parent=0 // pred_fallthru
    _
  // Predicated region
  $region22: #{geognn_layer_forward.3} parent=0 // pred_check
    _
  $region23: #{geognn_layer_forward.3} parent=0 // pred_check_branch
    %70 = sbr.rel (0) target = $region25
  $region24: #{geognn_layer_forward.3} parent=0 // pred_region
    _
  $region25: #{geognn_layer_forward.3} parent=0 // pred_fallthru
    _
  // Predicated region
  $region26: #{geognn_layer_forward.3} parent=0 // pred_check
    _
  $region27: #{geognn_layer_forward.3} parent=0 // pred_check_branch
    %72 = sbr.rel (0) target = $region29
  $region28: #{geognn_layer_forward.3} parent=0 // pred_region
    _
  $region29: #{geognn_layer_forward.3} parent=0 // pred_fallthru
    _
  // Predicated region
  $region30: #{geognn_layer_forward.3} parent=0 // pred_check
    _
  $region31: #{geognn_layer_forward.3} parent=0 // pred_check_branch
    %74 = sbr.rel (0) target = $region33
  $region32: #{geognn_layer_forward.3} parent=0 // pred_region
    _
  $region33: #{geognn_layer_forward.3} parent=0 // pred_fallthru
    _
  // Predicated region
  $region34: #{geognn_layer_forward.3} parent=0 // pred_check
    _
  $region35: #{geognn_layer_forward.3} parent=0 // pred_check_branch
    %76 = sbr.rel (0) target = $region37
  $region36: #{geognn_layer_forward.3} parent=0 // pred_region
    _
  $region37: #{geognn_layer_forward.3} parent=0 // pred_fallthru
    _
  %s77 = sld [smem:[#allocation5]]
  %p78 = scmp.gt.s32.totalorder %s77, 1
  %s79 = scalar_select %p78, %s77, 1
  %s80 = ssub.s32 %s79, 1
  %s81 = sld [smem:[#allocation4]]
  %p82 = scmp.lt.s32.totalorder 0, %s80
  %s83 = scalar_select %p82, 0, %s80
  %s84 = sadd.s32 %s81, %s83
  %p85 = scmp.lt.s32.totalorder %s84, 0
  %s86 = scalar_select %p85, %s84, 0
  %s87 = scalar_lea.vmem %s2, %s86
  %s88 = sld [smem:[#allocation5]]
  %p89 = scmp.gt.s32.totalorder %s88, 1
  %s90 = scalar_select %p89, %s88, 1
  %s91 = ssub.s32 %s90, 1
  %s92 = sld [smem:[#allocation4]]
  %p93 = scmp.lt.s32.totalorder 0, %s91
  %s94 = scalar_select %p93, 0, %s91
  %s95 = sadd.s32 %s92, %s94
  %s96 = smul.u32 16, %s95
  %p97 = scmp.lt.s32.totalorder %s96, 15
  %s98 = scalar_select %p97, %s96, 15
  %s99 = smul.addr %s98, 4
  %s100 = scalar_lea.vmem %s3, %s99
  %s101 = sld [smem:[#allocation5]]
  %p102 = scmp.gt.s32.totalorder %s101, 1
  %s103 = scalar_select %p102, %s101, 1
  %s104 = ssub.s32 %s103, 1
  %s105 = sld [smem:[#allocation4]]
  %p106 = scmp.lt.s32.totalorder 0, %s104
  %s107 = scalar_select %p106, 0, %s104
  %s108 = sadd.s32 %s105, %s107
  %p109 = scmp.lt.s32.totalorder %s108, 0
  %s110 = scalar_select %p109, %s108, 0
  %s111 = scalar_lea.vmem %s2, %s110
  %s112 = sld [smem:[#allocation5]]
  %p113 = scmp.gt.s32.totalorder %s112, 1
  %s114 = scalar_select %p113, %s112, 1
  %s115 = ssub.s32 %s114, 1
  %s116 = sld [smem:[#allocation4]]
  %p117 = scmp.lt.s32.totalorder 0, %s115
  %s118 = scalar_select %p117, 0, %s115
  %s119 = sadd.s32 %s116, %s118
  %s120 = sld [smem:[#allocation5]]
  %p121 = scmp.gt.s32.totalorder %s120, 1
  %s122 = scalar_select %p121, %s120, 1
  %s123 = ssub.s32 %s122, 1
  %s124 = sld [smem:[#allocation4]]
  %p125 = scmp.lt.s32.totalorder 0, %s123
  %s126 = scalar_select %p125, 0, %s123
  %s127 = sadd.s32 %s124, %s126
  %s128 = smul.u32 16, %s127
  %p129 = scmp.lt.s32.totalorder %s128, 15
  %s130 = scalar_select %p129, %s128, 15
  %s131 = smul.addr %s130, 4
  %s132 = scalar_lea.vmem %s3, %s131
  %s133 = sld [smem:[#allocation5]]
  %p134 = scmp.gt.s32.totalorder %s133, 1
  %s135 = scalar_select %p134, %s133, 1
  %s136 = ssub.s32 %s135, 1
  %s137 = sld [smem:[#allocation4]]
  %p138 = scmp.lt.s32.totalorder 0, %s136
  %s139 = scalar_select %p138, 0, %s136
  %s140 = sadd.s32 %s137, %s139
  %s141 = smul.u32 16, %s140
  %p143 = scmp.eq.s32.totalorder 0, 0
  // Predicated region
  $region38: #{geognn_layer_forward.3} parent=0 // pred_check
    %p144 = pneg %p143
  $region39: #{geognn_layer_forward.3} parent=0 // pred_check_branch
    %146 = sbr.rel (%p144) target = $region41
  $region40: #{geognn_layer_forward.3} parent=0 // pred_region
    %vm147 = vcmask 261120
    %148 = vst.msk [vmem:[#allocation2] sm:$0xff] %vm147, 0.0
  $region41: #{geognn_layer_forward.3} parent=0 // pred_fallthru
    _
  %s149 = sld [smem:[#allocation5]]
  %p150 = scmp.lt.s32.totalorder 0, %s149
  // Predicated region
  $region42: #{geognn_layer_forward.3} parent=0 // pred_check
    %p151 = pneg %p150
  $region43: #{geognn_layer_forward.3} parent=0 // pred_check_branch
    %153 = sbr.rel (%p151) target = $region45
  $region44: #{geognn_layer_forward.3} parent=0 // pred_region
    %v154 = vlaneseq
    %v155 = vshrl.u32 %v154, 7
    %v156 = vld [vmem:[%s111] sm:$0x1]
    %s157 = smul.u32 0, 8
    %v158 = vstv %s157
    %v159 = vsub.s32 %v156, %v158
    %v160 = vperm.slane %v159, 0
    %vm161 = vcmp.eq.s32.totalorder %v155, %v160
    %v162 = vsel %vm161, 1, 0
    %v163 = vcvt.s32.f32 %v162
    %v164 = vpack.c.bf16 %v163, %v163
    %v165 = vld [vmem:[#allocation2] sm:$0xff]
    %v166 = vld [vmem:[%s132] sm:$0xf]
    %v167 = vld [vmem:[%s132 + $0x4] sm:$0xf]
    %v168 = vld [vmem:[%s132 + $0x8] sm:$0xf]
    %v169 = vld [vmem:[%s132 + $0xc] sm:$0xf]
    %v170 = vld [vmem:[%s132 + $0x10] sm:$0xf]
    %v171 = vld [vmem:[%s132 + $0x14] sm:$0xf]
    %v172 = vld [vmem:[%s132 + $0x18] sm:$0xf]
    %v173 = vld [vmem:[%s132 + $0x1c] sm:$0xf]
    %v174 = vld [vmem:[%s132 + $0x20] sm:$0xf]
    %v175 = vld [vmem:[%s132 + $0x24] sm:$0xf]
    %v176 = vld [vmem:[%s132 + $0x28] sm:$0xf]
    %v177 = vld [vmem:[%s132 + $0x2c] sm:$0xf]
    %v178 = vld [vmem:[%s132 + $0x30] sm:$0xf]
    %v179 = vld [vmem:[%s132 + $0x34] sm:$0xf]
    %v180 = vld [vmem:[%s132 + $0x38] sm:$0xf]
    %v181 = vld [vmem:[%s132 + $0x3c] sm:$0xf]
    %v198 = vunpack.c.l.b16 %v166
    %v199 = vunpack.c.l.b16 %v167
    %v200 = vunpack.c.l.b16 %v168
    %v201 = vunpack.c.l.b16 %v169
    %v202 = vunpack.c.l.b16 %v170
    %v203 = vunpack.c.l.b16 %v171
    %v204 = vunpack.c.l.b16 %v172
    %v205 = vunpack.c.l.b16 %v173
    %v206 = vunpack.c.l.b16 %v174
    %v207 = vunpack.c.l.b16 %v175
    %v208 = vunpack.c.l.b16 %v176
    %v209 = vunpack.c.l.b16 %v177
    %v210 = vunpack.c.l.b16 %v178
    %v211 = vunpack.c.l.b16 %v179
    %v212 = vunpack.c.l.b16 %v180
    %v213 = vunpack.c.l.b16 %v181
    %v214 = vpack.c.b16 %v199, %v198
    %v215 = vpack.c.b16 %v201, %v200
    %v216 = vpack.c.b16 %v203, %v202
    %v217 = vpack.c.b16 %v205, %v204
    %v218 = vpack.c.b16 %v207, %v206
    %v219 = vpack.c.b16 %v209, %v208
    %v220 = vpack.c.b16 %v211, %v210
    %v221 = vpack.c.b16 %v213, %v212
    %230 = vmatpush.bf16.msra.mxu0 %v221
    %231 = vmatpush.bf16.msra.mxu0 %v220
    %232 = vmatpush.bf16.msra.mxu0 %v219
    %233 = vmatpush.bf16.msra.mxu0 %v218
    %234 = vmatpush.bf16.msra.mxu0 %v217
    %235 = vmatpush.bf16.msra.mxu0 %v216
    %236 = vmatpush.bf16.msra.mxu0 %v215
    %237 = vmatpush.bf16.msra.mxu0 %v214
    %238 = vmatmul.bf16.gmra.mxu0 %v164
    %v239 = vpop.f32.mrf.mxu0
    %v240 = vadd.f32 0.0, %v239
    %v241 = vpop.f32.mrf.mxu0
    %242 = vdwg.mxu0
    %v243 = vadd.f32 %v165, %v240
    %vm244 = vcmask 261120
    %245 = vst.msk [vmem:[#allocation2] sm:$0xff] %vm244, %v243
  $region45: #{geognn_layer_forward.3} parent=0 // pred_fallthru
    _
  // Predicated region
  $region46: #{geognn_layer_forward.3} parent=0 // pred_check
    %p246 = pneg %p143
  $region47: #{geognn_layer_forward.3} parent=0 // pred_check_branch
    %248 = sbr.rel (%p246) target = $region49
  $region48: #{geognn_layer_forward.3} parent=0 // pred_region
    %v249 = vld [vmem:[#allocation2] sm:$0xff]
    %v250 = vpack.c.bf16 %v249, %v249
    %v251 = vld [vmem:[%s5] sm:$0xf]
    %v252 = vld [vmem:[%s5 + $0x4] sm:$0xf]
    %v253 = vld [vmem:[%s5 + $0x8] sm:$0xf]
    %v254 = vld [vmem:[%s5 + $0xc] sm:$0xf]
    %v255 = vld [vmem:[%s6] sm:$0x1]
    %v257 = vperm.slane %v255, 0
    %v263 = vunpack.c.l.b16 %v251
    %v264 = vunpack.c.l.b16 %v252
    %v265 = vunpack.c.l.b16 %v253
    %v266 = vunpack.c.l.b16 %v254
    %v267 = vpack.c.b16 %v264, %v263
    %v268 = vpack.c.b16 %v266, %v265
    %vm271 = vcmask 261120
    %v273 = vsel %vm271, %v250, 0
    %275 = vmatpush.bf16.msra.mxu0 0
    %276 = vmatpush.bf16.msra.mxu0 0
    %277 = vmatpush.bf16.msra.mxu0 0
    %278 = vmatpush.bf16.msra.mxu0 0
    %279 = vmatpush.bf16.msra.mxu0 0
    %280 = vmatpush.bf16.msra.mxu0 0
    %281 = vmatpush.bf16.msra.mxu0 %v268
    %282 = vmatpush.bf16.msra.mxu0 %v267
    %283 = vmatmul.bf16.gmra.mxu0 %v273
    %v284 = vpop.f32.mrf.mxu0
    %v285 = vadd.f32 %v257, %v284
    %v286 = vpop.f32.mrf.mxu0
    %287 = vdwg.mxu0
    %v288 = vmax.f32 %v285, 0.0
    %v289 = vpack.c.bf16 %v288, %v288
    %v290 = vld [vmem:[%s7] sm:$0xf]
    %v291 = vld [vmem:[%s7 + $0x4] sm:$0xf]
    %v292 = vld [vmem:[%s7 + $0x8] sm:$0xf]
    %v293 = vld [vmem:[%s7 + $0xc] sm:$0xf]
    %v294 = vld [vmem:[%s7 + $0x10] sm:$0xf]
    %v295 = vld [vmem:[%s7 + $0x14] sm:$0xf]
    %v296 = vld [vmem:[%s7 + $0x18] sm:$0xf]
    %v297 = vld [vmem:[%s7 + $0x1c] sm:$0xf]
    %v298 = vld [vmem:[%s7 + $0x20] sm:$0xf]
    %v299 = vld [vmem:[%s7 + $0x24] sm:$0xf]
    %v300 = vld [vmem:[%s7 + $0x28] sm:$0xf]
    %v301 = vld [vmem:[%s7 + $0x2c] sm:$0xf]
    %v302 = vld [vmem:[%s7 + $0x30] sm:$0xf]
    %v303 = vld [vmem:[%s7 + $0x34] sm:$0xf]
    %v304 = vld [vmem:[%s7 + $0x38] sm:$0xf]
    %v305 = vld [vmem:[%s7 + $0x3c] sm:$0xf]
    %v306 = vld [vmem:[%s8] sm:$0x1]
    %v308 = vperm.slane %v306, 0
    %v326 = vunpack.c.l.b16 %v290
    %v327 = vunpack.c.l.b16 %v291
    %v328 = vunpack.c.l.b16 %v292
    %v329 = vunpack.c.l.b16 %v293
    %v330 = vunpack.c.l.b16 %v294
    %v331 = vunpack.c.l.b16 %v295
    %v332 = vunpack.c.l.b16 %v296
    %v333 = vunpack.c.l.b16 %v297
    %v334 = vunpack.c.l.b16 %v298
    %v335 = vunpack.c.l.b16 %v299
    %v336 = vunpack.c.l.b16 %v300
    %v337 = vunpack.c.l.b16 %v301
    %v338 = vunpack.c.l.b16 %v302
    %v339 = vunpack.c.l.b16 %v303
    %v340 = vunpack.c.l.b16 %v304
    %v341 = vunpack.c.l.b16 %v305
    %v342 = vpack.c.b16 %v327, %v326
    %v343 = vpack.c.b16 %v329, %v328
    %v344 = vpack.c.b16 %v331, %v330
    %v345 = vpack.c.b16 %v333, %v332
    %v346 = vpack.c.b16 %v335, %v334
    %v347 = vpack.c.b16 %v337, %v336
    %v348 = vpack.c.b16 %v339, %v338
    %v349 = vpack.c.b16 %v341, %v340
    %358 = vmatpush.bf16.msra.mxu0 %v349
    %359 = vmatpush.bf16.msra.mxu0 %v348
    %360 = vmatpush.bf16.msra.mxu0 %v347
    %361 = vmatpush.bf16.msra.mxu0 %v346
    %362 = vmatpush.bf16.msra.mxu0 %v345
    %363 = vmatpush.bf16.msra.mxu0 %v344
    %364 = vmatpush.bf16.msra.mxu0 %v343
    %365 = vmatpush.bf16.msra.mxu0 %v342
    %366 = vmatmul.bf16.gmra.mxu0 %v289
    %v367 = vpop.f32.mrf.mxu0
    %v368 = vadd.f32 %v308, %v367
    %v369 = vpop.f32.mrf.mxu0
    %370 = vdwg.mxu0
    %v371 = vlaneseq
    %v372 = vand.u32 %v371, 127
    %vm373 = vcmp.lt.s32.totalorder %v372, 32
    %v374 = vsel %vm373, 1, 0
    %v375 = vcvt.s32.f32 %v374
    %v376 = vmul.f32 %v368, %v375
    %377 = vadd.xlane.f32.xlu0 %v376
    %v378 = vpop.xlane.xlu0 %377
    %v379 = vmul.f32 %v378, 0.03125
    %v380 = vsub.f32 %v376, %v379
    %v381 = vmul.f32 %v380, %v375
    %v382 = vmul.f32 %v381, %v381
    %383 = vadd.xlane.f32.xlu0 %v382
    %v384 = vpop.xlane.xlu0 %383
    %v385 = vmul.f32 %v384, 0.03125
    %v386 = vadd.f32 %v385, 1e-05
    %v387 = vrsqrt.pop %v386
    %v388 = vmul.f32 %v387, %v386
    %v389 = vmul.f32 %v388, %v387
    %v390 = vmul.f32 0.5, %v389
    %v391 = vsub.f32 1.5, %v390
    %v392 = vmul.f32 %v387, %v391
    %vm393 = vweird.f32 %v386
    %vm394 = vweird.f32 %v387
    %vm395 = vmor %vm393, %vm394
    %v396 = vsel %vm395, %v387, %v392
    %v397 = vmul.f32 %v381, %v396
    %v398 = vld [vmem:[%s9] sm:$0x1]
    %v400 = vperm.slane %v398, 0
    %v402 = vmul.f32 %v397, %v400
    %v403 = vld [vmem:[%s10] sm:$0x1]
    %v405 = vperm.slane %v403, 0
    %v407 = vadd.f32 %v402, %v405
    %v408 = vmax.f32 %v407, 0.0
    %v409 = vld [vmem:[%s4] sm:$0xff]
    %v410 = vadd.f32 %v408, %v409
    %411 = vst [vmem:[%s11] sm:$0xff] %v410
  $region49: #{geognn_layer_forward.3} parent=0 // pred_fallthru
    _
  // Predicated region
  $region50: #{geognn_layer_forward.3} parent=0 // pred_check
    _
  $region51: #{geognn_layer_forward.3} parent=0 // pred_check_branch
    %413 = sbr.rel (0) target = $region53
  $region52: #{geognn_layer_forward.3} parent=0 // pred_region
    _
  $region53: #{geognn_layer_forward.3} parent=0 // pred_fallthru
    _
  // Predicated region
  $region54: #{geognn_layer_forward.3} parent=0 // pred_check
    _
  $region55: #{geognn_layer_forward.3} parent=0 // pred_check_branch
    %415 = sbr.rel (0) target = $region57
  $region56: #{geognn_layer_forward.3} parent=0 // pred_region
    _
  $region57: #{geognn_layer_forward.3} parent=0 // pred_fallthru
    _

</llo_original>
